<compile_context>
chip_gen: v5e
topology: v5e:2x2
jax: 0.10.0
libtpu: 0.0.40
codegen_flags: <defaults>
</compile_context>

<pallas_src>
import functools

import jax
import jax.numpy as jnp
import numpy as np
from jax.experimental import pallas as pl
from jax.experimental.pallas import tpu as pltpu


# ---------------------------------------------------------------------------
# VMEM budgeting helpers
# ---------------------------------------------------------------------------
def _round_up(x, m):
    return (x + m - 1) // m * m


@functools.lru_cache(maxsize=1)
def _vmem_capacity_bytes():
    try:
        return int(pltpu.get_tpu_info().vmem_capacity_bytes)
    except Exception:
        return 0


def _vmem_limit_and_budget():
    cap = _vmem_capacity_bytes()
    if cap <= 0:
        # Unknown chip: stay under the default scoped-VMEM limit.
        return None, 12 * 2**20
    limit = min((cap * 3) // 4, 96 * 2**20)      # ~96 MiB on v5e/v6e, ~48 MiB on v7x
    return limit, limit // 2


def _tile_vmem_bytes(th, w_in, w_out, cin, cout, stride, esize):
    """Rough per-step VMEM footprint (lane/sublane padding + double buffering)."""
    lane = 128
    k = 9 * cin
    rows_core = stride * th
    core = rows_core * _round_up(w_in, 8) * _round_up(cin, lane) * esize * 2
    halo = 2 * 2 * _round_up(w_in, 8) * _round_up(cin, lane) * esize * 2
    xpad = (rows_core + 2) * _round_up(w_in + 2, 8) * _round_up(cin, lane) * esize
    patch = _round_up(th * w_out, 8) * _round_up(k, lane) * esize
    wts = _round_up(k, 8) * _round_up(cout, lane) * esize
    acc = _round_up(th * w_out, 8) * _round_up(cout, lane) * 4
    outb = th * _round_up(w_out, 8) * _round_up(cout, lane) * esize * 2
    return core + halo + xpad + patch + wts + acc + outb


def _pick_tile_rows(h_out, w_in, w_out, cin, cout, stride, esize, budget):
    best = 1
    for th in range(1, h_out + 1):
        if h_out % th:
            continue
        if _tile_vmem_bytes(th, w_in, w_out, cin, cout, stride, esize) <= budget:
            best = th
    return best


# ---------------------------------------------------------------------------
# Kernel: one (batch, row-tile) step of a 3x3 conv (pad=1, stride 1 or 2) + SiLU
# ---------------------------------------------------------------------------
def _conv3x3_kernel(core_ref, top_ref, bot_ref, w_ref, b_ref, o_ref, xpad_ref, *,
                    th, w_in, w_out, cin, cout, stride, apply_silu):
    """
    core_ref : (stride*th, w_in, cin)   input rows covered by this output tile
    top_ref  : (1, w_in, cin)           row just above (masked to 0 at the image top)
    bot_ref  : (1, w_in, cin)           row just below (stride-1 only)
    w_ref    : (9*cin, cout)            weights with (ky, kx, cin) folded into K
    b_ref    : (1, cout)                bias (f32)
    o_ref    : (th, w_out, cout)        output tile
    xpad_ref : (stride*th + 2, w_in + 2, cin) zero-padded input tile (VMEM scratch)
    """
    s = stride
    rows_core = s * th
    r = pl.program_id(1)
    cdtype = xpad_ref.dtype

    # ---- assemble the zero-padded input tile in VMEM (no host-side pad) ----
    zcol = jnp.zeros((rows_core + 2, 1, cin), cdtype)
    xpad_ref[pl.ds(0, rows_core + 2), pl.ds(0, 1), :] = zcol            # left zero col
    xpad_ref[pl.ds(0, rows_core + 2), pl.ds(w_in + 1, 1), :] = zcol     # right zero col
    xpad_ref[pl.ds(1, rows_core), pl.ds(1, w_in), :] = core_ref[...]
    tmask = (r > 0).astype(cdtype)                                      # top image edge
    xpad_ref[pl.ds(0, 1), pl.ds(1, w_in), :] = top_ref[...] * tmask
    if s == 1:                                                          # bottom halo only for stride-1
        bmask = (r < pl.num_programs(1) - 1).astype(cdtype)
        xpad_ref[pl.ds(rows_core + 1, 1), pl.ds(1, w_in), :] = bot_ref[...] * bmask

    # ---- im2col: 9 shifted (strided for stride-2) taps -> one K = 9*cin matmul ----
    taps = []
    for ky in range(3):
        for kx in range(3):
            if s == 1:
                tap = xpad_ref[pl.ds(ky, th), pl.ds(kx, w_out), :]
            else:
                tap = xpad_ref[pl.ds(ky, th, 2), pl.ds(kx, w_out, 2), :]
            taps.append(tap)
    patch = jnp.concatenate(taps, axis=-1).reshape(th * w_out, 9 * cin)

    acc = jnp.dot(patch, w_ref[...], preferred_element_type=jnp.float32)
    acc = acc + b_ref[...]
    if apply_silu:
        acc = acc * jax.nn.sigmoid(acc)                 # SiLU; exp/recip land on the EUP slot
    o_ref[...] = acc.reshape(th, w_out, cout).astype(o_ref.dtype)


# ---------------------------------------------------------------------------
# Wrapper for one conv layer
# ---------------------------------------------------------------------------
def conv3x3(x_nhwc, w_hwio, b, *, stride=1, apply_silu=True, compute_dtype=None,
            tile_rows=None):
    """3x3 conv, padding=1, stride in {1,2}, optional fused SiLU. NHWC in/out."""
    N, H, W, Cin = x_nhwc.shape
    Cout = w_hwio.shape[-1]
    assert stride in (1, 2)
    if stride == 2:
        assert H % 2 == 0 and W % 2 == 0, "stride-2 layers expect even spatial dims"
    H_out, W_out = H // stride, W // stride

    cdtype = jnp.dtype(compute_dtype) if compute_dtype is not None else x_nhwc.dtype
    vmem_limit, budget = _vmem_limit_and_budget()
    if tile_rows is None:
        th = _pick_tile_rows(H_out, W, W_out, Cin, Cout, stride,
                             jnp.dtype(cdtype).itemsize, budget)
    else:
        assert H_out % tile_rows == 0
        th = tile_rows
    rows_core = stride * th
    n_tiles = H_out // th

    x_c = x_nhwc.astype(cdtype)
    w2 = w_hwio.reshape(9 * Cin, Cout).astype(cdtype)    # (ky, kx, cin) folded into K
    b2 = b.reshape(1, Cout).astype(jnp.float32)

    kernel = functools.partial(_conv3x3_kernel, th=th, w_in=W, w_out=W_out,
                               cin=Cin, cout=Cout, stride=stride,
                               apply_silu=apply_silu)

    out = pl.pallas_call(
        kernel,
        out_shape=jax.ShapeDtypeStruct((N, H_out, W_out, Cout), cdtype),
        grid=(N, n_tiles),
        in_specs=[
            # core input rows of this output row-tile
            pl.BlockSpec((None, rows_core, W, Cin), lambda n, r: (n, r, 0, 0)),
            # one-row halo above (clamped; masked to zero at the image top)
            pl.BlockSpec((None, 1, W, Cin),
                         lambda n, r: (n, jnp.maximum(r * rows_core - 1, 0), 0, 0)),
            # one-row halo below (clamped; masked to zero at the image bottom)
            pl.BlockSpec((None, 1, W, Cin),
                         lambda n, r: (n, jnp.minimum((r + 1) * rows_core, H - 1), 0, 0)),
            # weights / bias stay resident across the whole grid
            pl.BlockSpec((9 * Cin, Cout), lambda n, r: (0, 0)),
            pl.BlockSpec((1, Cout), lambda n, r: (0, 0)),
        ],
        out_specs=pl.BlockSpec((None, th, W_out, Cout), lambda n, r: (n, r, 0, 0)),
        scratch_shapes=[pltpu.VMEM((rows_core + 2, W + 2, Cin), cdtype)],
        compiler_params=pltpu.CompilerParams(
            dimension_semantics=("parallel", "parallel"),
            vmem_limit_bytes=vmem_limit),
    )(x_c, x_c, x_c, w2, b2)
    return out


# ---------------------------------------------------------------------------
# Parameters + module forward
# ---------------------------------------------------------------------------
def init_params(key, in_channels, hidden_channels, out_channels):
    """Deterministic params matching the PyTorch module layout.

    Returns a list of (w_hwio, b, stride, apply_silu) in forward order.
    PyTorch Conv2d default init: U(-1/sqrt(fan_in), 1/sqrt(fan_in)), fan_in = Cin*9.
    """
    def conv_init(k, cin, cout):
        kw, kb = jax.random.split(k)
        bound = 1.0 / np.sqrt(cin * 9)
        w = jax.random.uniform(kw, (3, 3, cin, cout), jnp.float32, -bound, bound)
        b = jax.random.uniform(kb, (cout,), jnp.float32, -bound, bound)
        return w, b

    n_convs = 1 + 2 * (len(hidden_channels) - 1)
    keys = jax.random.split(key, n_convs)
    layers = []
    ki = 0
    # conv_in
    w, b = conv_init(keys[ki], in_channels, hidden_channels[0]); ki += 1
    layers.append((w, b, 1, True))
    # blocks
    for i in range(len(hidden_channels) - 1):
        w, b = conv_init(keys[ki], hidden_channels[i], hidden_channels[i]); ki += 1
        layers.append((w, b, 1, True))
        w, b = conv_init(keys[ki], hidden_channels[i], hidden_channels[i + 1]); ki += 1
        layers.append((w, b, 2, True))
    # conv_out: zero_module -> weights and bias all zero, no SiLU afterwards
    w0 = jnp.zeros((3, 3, hidden_channels[-1], out_channels), jnp.float32)
    b0 = jnp.zeros((out_channels,), jnp.float32)
    layers.append((w0, b0, 1, False))
    return layers


def controlnet_conditioning_embedding(x_nchw, layers, compute_dtype=None):
    """Forward pass equivalent to ControlNetConditioningEmbedding.forward (NCHW in/out)."""
    x = jnp.transpose(x_nchw, (0, 2, 3, 1))   # NCHW -> NHWC (channels on lanes)
    for (w, b, stride, silu) in layers:
        x = conv3x3(x, w, b, stride=stride, apply_silu=silu, compute_dtype=compute_dtype)
    x = x.astype(x_nchw.dtype)
    return jnp.transpose(x, (0, 3, 1, 2))     # NHWC -> NCHW


# ---------------------------------------------------------------------------
# Pure-XLA reference for validation
# ---------------------------------------------------------------------------
def _ref_conv(x_nhwc, w_hwio, b, stride, silu):
    y = jax.lax.conv_general_dilated(
        x_nhwc, w_hwio, window_strides=(stride, stride), padding=((1, 1), (1, 1)),
        dimension_numbers=("NHWC", "HWIO", "NHWC"),
        precision=jax.lax.Precision.HIGHEST) + b[None, None, None, :]
    if silu:
        y = y * jax.nn.sigmoid(y)
    return y


def _ref_forward(x_nchw, layers):
    x = jnp.transpose(x_nchw, (0, 2, 3, 1))
    for (w, b, stride, silu) in layers:
        x = _ref_conv(x, w, b, stride, silu)
    return jnp.transpose(x, (0, 3, 1, 2))


if __name__ == "__main__":
    key = jax.random.PRNGKey(0)
    kx, kp = jax.random.split(key)

    # small shapes consistent with the module: in_channels=3, hidden=[16, 32], out=32
    N, C, H, W = 2, 3, 16, 16
    hidden_channels = [16, 32]
    out_channels = 32

    x = jax.random.normal(kx, (N, C, H, W), dtype=jnp.float32)
    layers = init_params(kp, C, hidden_channels, out_channels)

    # full forward (conv_out is zero-initialized, so the result is zeros)
    y = jax.block_until_ready(controlnet_conditioning_embedding(x, layers))
    assert y.shape == (N, out_channels, H // 2, W // 2), y.shape
    y_ref = _ref_forward(x, layers)
    np.testing.assert_allclose(np.asarray(y), np.asarray(y_ref), atol=1e-4, rtol=1e-4)

    # non-trivial values: everything up to (but excluding) the zeroed conv_out
    h = jax.block_until_ready(controlnet_conditioning_embedding(x, layers[:-1]))
    h_ref = _ref_forward(x, layers[:-1])
    np.testing.assert_allclose(np.asarray(h), np.asarray(h_ref), atol=1e-3, rtol=1e-3)

    # force multi-row tiling so the halo masking path is exercised (stride-1 layer)
    x_nhwc = jnp.transpose(x, (0, 2, 3, 1))
    w0, b0, s0, silu0 = layers[0]
    t0 = jax.block_until_ready(conv3x3(x_nhwc, w0, b0, stride=s0, apply_silu=silu0,
                                       tile_rows=4))
    np.testing.assert_allclose(np.asarray(t0),
                               np.asarray(_ref_conv(x_nhwc, w0, b0, s0, silu0)),
                               atol=1e-4, rtol=1e-4)

    # force multi-row tiling on the direct stride-2 path (downsampling conv)
    h1 = x_nhwc
    for (w_, b_, s_, silu_) in layers[:2]:
        h1 = _ref_conv(h1, w_, b_, s_, silu_)
    wd, bd, sd, silud = layers[2]
    t2 = jax.block_until_ready(conv3x3(h1, wd, bd, stride=sd, apply_silu=silud,
                                       tile_rows=2))
    np.testing.assert_allclose(np.asarray(t2),
                               np.asarray(_ref_conv(h1, wd, bd, sd, silud)),
                               atol=1e-3, rtol=1e-3)

    # optional bf16-operand path (f32 accumulation) for v6e/v7x MXU throughput
    hb = jax.block_until_ready(
        controlnet_conditioning_embedding(x, layers[:-1], compute_dtype=jnp.bfloat16))
    np.testing.assert_allclose(np.asarray(hb).astype(np.float32), np.asarray(h_ref),
                               atol=5e-2, rtol=5e-2)

    print("KERNEL_OK")
</pallas_src>

<mosaic_0001>
module attributes {stable_mosaic.version = 11 : i64} {
  func.func @_conv3x3_kernel(%arg0: i32, %arg1: i32, %arg2: memref<1x16x16x3xf32, #tpu.memory_space<vmem>>, %arg3: memref<1x1x16x3xf32, #tpu.memory_space<vmem>>, %arg4: memref<1x1x16x3xf32, #tpu.memory_space<vmem>>, %arg5: memref<27x16xf32, #tpu.memory_space<vmem>>, %arg6: memref<1x16xf32, #tpu.memory_space<vmem>>, %arg7: memref<1x16x16x16xf32, #tpu.memory_space<vmem>>, %arg8: memref<18x18x3xf32, #tpu.memory_space<vmem>>) attributes {dimension_semantics = [#tpu.dimension_semantics<parallel>, #tpu.dimension_semantics<parallel>], iteration_bounds = array<i64: 2, 1>, scalar_prefetch = 0 : i64, scratch_operands = 1 : i64, tpu.core_type = #tpu.core_type<tc>, window_params = [{transform_indices = @transform_0, window_bounds = array<i64: 1, 16, 16, 3>}, {transform_indices = @transform_1, window_bounds = array<i64: 1, 1, 16, 3>}, {transform_indices = @transform_2, window_bounds = array<i64: 1, 1, 16, 3>}, {pipeline_mode = #tpu.pipeline_mode<synchronous>, transform_indices = @transform_3, window_bounds = array<i64: 27, 16>}, {pipeline_mode = #tpu.pipeline_mode<synchronous>, transform_indices = @transform_4, window_bounds = array<i64: 1, 16>}, {transform_indices = @transform_5, window_bounds = array<i64: 1, 16, 16, 16>}]} {
    %cst = arith.constant 0.000000e+00 : f32
    %0 = vector.broadcast %cst : f32 to vector<18x1x3xf32>
    %c0 = arith.constant 0 : index
    %c0_0 = arith.constant 0 : index
    %c0_1 = arith.constant 0 : index
    %1 = vector.load %arg8[%c0, %c0_0, %c0_1] : memref<18x18x3xf32, #tpu.memory_space<vmem>>, vector<18x1x3xf32>
    tpu.vector_store %arg8[%c0, %c0_0, %c0_1], %0 {strides = array<i32>} : memref<18x18x3xf32, #tpu.memory_space<vmem>>, vector<18x1x3xf32>,
    %c0_2 = arith.constant 0 : index
    %c17 = arith.constant 17 : index
    %c0_3 = arith.constant 0 : index
    %2 = vector.load %arg8[%c0_2, %c17, %c0_3] : memref<18x18x3xf32, #tpu.memory_space<vmem>>, vector<18x1x3xf32>
    tpu.vector_store %arg8[%c0_2, %c17, %c0_3], %0 {strides = array<i32>} : memref<18x18x3xf32, #tpu.memory_space<vmem>>, vector<18x1x3xf32>,
    %c0_4 = arith.constant 0 : index
    %c0_5 = arith.constant 0 : index
    %c0_6 = arith.constant 0 : index
    %c0_7 = arith.constant 0 : index
    %3 = vector.load %arg2[%c0_4, %c0_5, %c0_6, %c0_7] : memref<1x16x16x3xf32, #tpu.memory_space<vmem>>, vector<1x16x16x3xf32>
    %4 = vector.shape_cast %3 : vector<1x16x16x3xf32> to vector<16x16x3xf32>
    %c1 = arith.constant 1 : index
    %c1_8 = arith.constant 1 : index
    %c0_9 = arith.constant 0 : index
    %5 = vector.load %arg8[%c1, %c1_8, %c0_9] : memref<18x18x3xf32, #tpu.memory_space<vmem>>, vector<16x16x3xf32>
    tpu.vector_store %arg8[%c1, %c1_8, %c0_9], %4 {strides = array<i32>} : memref<18x18x3xf32, #tpu.memory_space<vmem>>, vector<16x16x3xf32>,
    %c0_i32 = arith.constant 0 : i32
    %6 = arith.cmpi sgt, %arg1, %c0_i32 : i32
    %7 = arith.extui %6 : i1 to i32
    %8 = arith.sitofp %7 : i32 to f32
    %c0_10 = arith.constant 0 : index
    %c0_11 = arith.constant 0 : index
    %c0_12 = arith.constant 0 : index
    %c0_13 = arith.constant 0 : index
    %9 = vector.load %arg3[%c0_10, %c0_11, %c0_12, %c0_13] : memref<1x1x16x3xf32, #tpu.memory_space<vmem>>, vector<1x1x16x3xf32>
    %10 = vector.shape_cast %9 : vector<1x1x16x3xf32> to vector<1x16x3xf32>
    %11 = vector.broadcast %8 : f32 to vector<1x16x3xf32>
    %12 = arith.mulf %10, %11 : vector<1x16x3xf32>
    %c0_14 = arith.constant 0 : index
    %c1_15 = arith.constant 1 : index
    %c0_16 = arith.constant 0 : index
    %13 = vector.load %arg8[%c0_14, %c1_15, %c0_16] : memref<18x18x3xf32, #tpu.memory_space<vmem>>, vector<1x16x3xf32>
    tpu.vector_store %arg8[%c0_14, %c1_15, %c0_16], %12 {strides = array<i32>} : memref<18x18x3xf32, #tpu.memory_space<vmem>>, vector<1x16x3xf32>,
    %c0_i32_17 = arith.constant 0 : i32
    %14 = arith.cmpi slt, %arg1, %c0_i32_17 : i32
    %15 = arith.extui %14 : i1 to i32
    %16 = arith.sitofp %15 : i32 to f32
    %c0_18 = arith.constant 0 : index
    %c0_19 = arith.constant 0 : index
    %c0_20 = arith.constant 0 : index
    %c0_21 = arith.constant 0 : index
    %17 = vector.load %arg4[%c0_18, %c0_19, %c0_20, %c0_21] : memref<1x1x16x3xf32, #tpu.memory_space<vmem>>, vector<1x1x16x3xf32>
    %18 = vector.shape_cast %17 : vector<1x1x16x3xf32> to vector<1x16x3xf32>
    %19 = vector.broadcast %16 : f32 to vector<1x16x3xf32>
    %20 = arith.mulf %18, %19 : vector<1x16x3xf32>
    %c17_22 = arith.constant 17 : index
    %c1_23 = arith.constant 1 : index
    %c0_24 = arith.constant 0 : index
    %21 = vector.load %arg8[%c17_22, %c1_23, %c0_24] : memref<18x18x3xf32, #tpu.memory_space<vmem>>, vector<1x16x3xf32>
    tpu.vector_store %arg8[%c17_22, %c1_23, %c0_24], %20 {strides = array<i32>} : memref<18x18x3xf32, #tpu.memory_space<vmem>>, vector<1x16x3xf32>,
    %c0_25 = arith.constant 0 : index
    %c0_26 = arith.constant 0 : index
    %c0_27 = arith.constant 0 : index
    %22 = vector.load %arg8[%c0_25, %c0_26, %c0_27] : memref<18x18x3xf32, #tpu.memory_space<vmem>>, vector<16x16x3xf32>
    %c0_28 = arith.constant 0 : index
    %c1_29 = arith.constant 1 : index
    %c0_30 = arith.constant 0 : index
    %23 = vector.load %arg8[%c0_28, %c1_29, %c0_30] : memref<18x18x3xf32, #tpu.memory_space<vmem>>, vector<16x16x3xf32>
    %c0_31 = arith.constant 0 : index
    %c2 = arith.constant 2 : index
    %c0_32 = arith.constant 0 : index
    %24 = vector.load %arg8[%c0_31, %c2, %c0_32] : memref<18x18x3xf32, #tpu.memory_space<vmem>>, vector<16x16x3xf32>
    %c1_33 = arith.constant 1 : index
    %c0_34 = arith.constant 0 : index
    %c0_35 = arith.constant 0 : index
    %25 = vector.load %arg8[%c1_33, %c0_34, %c0_35] : memref<18x18x3xf32, #tpu.memory_space<vmem>>, vector<16x16x3xf32>
    %c1_36 = arith.constant 1 : index
    %c1_37 = arith.constant 1 : index
    %c0_38 = arith.constant 0 : index
    %26 = vector.load %arg8[%c1_36, %c1_37, %c0_38] : memref<18x18x3xf32, #tpu.memory_space<vmem>>, vector<16x16x3xf32>
    %c1_39 = arith.constant 1 : index
    %c2_40 = arith.constant 2 : index
    %c0_41 = arith.constant 0 : index
    %27 = vector.load %arg8[%c1_39, %c2_40, %c0_41] : memref<18x18x3xf32, #tpu.memory_space<vmem>>, vector<16x16x3xf32>
    %c2_42 = arith.constant 2 : index
    %c0_43 = arith.constant 0 : index
    %c0_44 = arith.constant 0 : index
    %28 = vector.load %arg8[%c2_42, %c0_43, %c0_44] : memref<18x18x3xf32, #tpu.memory_space<vmem>>, vector<16x16x3xf32>
    %c2_45 = arith.constant 2 : index
    %c1_46 = arith.constant 1 : index
    %c0_47 = arith.constant 0 : index
    %29 = vector.load %arg8[%c2_45, %c1_46, %c0_47] : memref<18x18x3xf32, #tpu.memory_space<vmem>>, vector<16x16x3xf32>
    %c2_48 = arith.constant 2 : index
    %c2_49 = arith.constant 2 : index
    %c0_50 = arith.constant 0 : index
    %30 = vector.load %arg8[%c2_48, %c2_49, %c0_50] : memref<18x18x3xf32, #tpu.memory_space<vmem>>, vector<16x16x3xf32>
    %31 = tpu.concatenate %22, %23, %24, %25, %26, %27, %28, %29, %30 in 2 : vector<16x16x3xf32>, vector<16x16x3xf32>, vector<16x16x3xf32>, vector<16x16x3xf32>, vector<16x16x3xf32>, vector<16x16x3xf32>, vector<16x16x3xf32>, vector<16x16x3xf32>, vector<16x16x3xf32> -> vector<16x16x27xf32>
    %32 = vector.shape_cast %31 : vector<16x16x27xf32> to vector<256x27xf32>
    %c0_51 = arith.constant 0 : index
    %c0_52 = arith.constant 0 : index
    %33 = vector.load %arg5[%c0_51, %c0_52] : memref<27x16xf32, #tpu.memory_space<vmem>>, vector<27x16xf32>
    %cst_53 = arith.constant dense<0.000000e+00> : vector<256x16xf32>
    %34 = tpu.matmul %32, %33, %cst_53 {dimension_numbers = #tpu.dot_dimension_numbers<[1], [0], [0], [1], [0, 0, 1, 1], [], []>} : vector<256x27xf32>, vector<27x16xf32>, vector<256x16xf32> -> vector<256x16xf32>
    %c0_54 = arith.constant 0 : index
    %c0_55 = arith.constant 0 : index
    %35 = vector.load %arg6[%c0_54, %c0_55] : memref<1x16xf32, #tpu.memory_space<vmem>>, vector<1x16xf32>
    %36 = vector.broadcast %35 : vector<1x16xf32> to vector<256x16xf32>
    %37 = arith.addf %34, %36 : vector<256x16xf32>
    %38 = arith.negf %37 : vector<256x16xf32>
    %39 = math.exp %38 : vector<256x16xf32>
    %cst_56 = arith.constant 1.000000e+00 : f32
    %40 = vector.broadcast %cst_56 : f32 to vector<256x16xf32>
    %41 = arith.addf %40, %39 : vector<256x16xf32>
    %42 = arith.divf %40, %41 : vector<256x16xf32>
    %43 = arith.mulf %37, %42 : vector<256x16xf32>
    %44 = vector.shape_cast %43 : vector<256x16xf32> to vector<16x16x16xf32>
    %c0_57 = arith.constant 0 : index
    %c0_58 = arith.constant 0 : index
    %c0_59 = arith.constant 0 : index
    %c0_60 = arith.constant 0 : index
    %45 = vector.load %arg7[%c0_57, %c0_58, %c0_59, %c0_60] : memref<1x16x16x16xf32, #tpu.memory_space<vmem>>, vector<1x16x16x16xf32>
    %46 = vector.shape_cast %45 : vector<1x16x16x16xf32> to vector<16x16x16xf32>
    %47 = vector.shape_cast %44 : vector<16x16x16xf32> to vector<1x16x16x16xf32>
    tpu.vector_store %arg7[%c0_57, %c0_58, %c0_59, %c0_60], %47 {strides = array<i32>} : memref<1x16x16x16xf32, #tpu.memory_space<vmem>>, vector<1x16x16x16xf32>,
    return
  }
  func.func @transform_0(%arg0: i32, %arg1: i32) -> (i32, i32, i32, i32) {
    %c0_i32 = arith.constant 0 : i32
    %c0_i32_0 = arith.constant 0 : i32
    %c0_i32_1 = arith.constant 0 : i32
    return %arg0, %arg1, %c0_i32, %c0_i32_0 : i32, i32, i32, i32
  }
  func.func @transform_1(%arg0: i32, %arg1: i32) -> (i32, i32, i32, i32) {
    %c16_i32 = arith.constant 16 : i32
    %0 = arith.muli %arg1, %c16_i32 : i32
    %c1_i32 = arith.constant 1 : i32
    %1 = arith.subi %0, %c1_i32 : i32
    %c0_i32 = arith.constant 0 : i32
    %2 = arith.maxsi %1, %c0_i32 : i32
    %c0_i32_0 = arith.constant 0 : i32
    %c0_i32_1 = arith.constant 0 : i32
    %c0_i32_2 = arith.constant 0 : i32
    return %arg0, %2, %c0_i32_0, %c0_i32_1 : i32, i32, i32, i32
  }
  func.func @transform_2(%arg0: i32, %arg1: i32) -> (i32, i32, i32, i32) {
    %c1_i32 = arith.constant 1 : i32
    %0 = arith.addi %arg1, %c1_i32 : i32
    %c16_i32 = arith.constant 16 : i32
    %1 = arith.muli %0, %c16_i32 : i32
    %c15_i32 = arith.constant 15 : i32
    %2 = arith.minsi %1, %c15_i32 : i32
    %c0_i32 = arith.constant 0 : i32
    %c0_i32_0 = arith.constant 0 : i32
    %c0_i32_1 = arith.constant 0 : i32
    return %arg0, %2, %c0_i32, %c0_i32_0 : i32, i32, i32, i32
  }
  func.func @transform_3(%arg0: i32, %arg1: i32) -> (i32, i32) {
    %c0_i32 = arith.constant 0 : i32
    %c0_i32_0 = arith.constant 0 : i32
    %c0_i32_1 = arith.constant 0 : i32
    return %c0_i32, %c0_i32_0 : i32, i32
  }
  func.func @transform_4(%arg0: i32, %arg1: i32) -> (i32, i32) {
    %c0_i32 = arith.constant 0 : i32
    %c0_i32_0 = arith.constant 0 : i32
    %c0_i32_1 = arith.constant 0 : i32
    return %c0_i32, %c0_i32_0 : i32, i32
  }
  func.func @transform_5(%arg0: i32, %arg1: i32) -> (i32, i32, i32, i32) {
    %c0_i32 = arith.constant 0 : i32
    %c0_i32_0 = arith.constant 0 : i32
    %c0_i32_1 = arith.constant 0 : i32
    return %arg0, %arg1, %c0_i32, %c0_i32_0 : i32, i32, i32, i32
  }
}

</mosaic_0001>

<llo_original>
// kernel: tpu_custom_call.1
$region0: #{tpu_custom_call.1}
  #allocation0 [shape = 'u32[]', space=smem, size = 0x4, offset = 0x4, fixed_abs, tag = 'smem constant byte address 0x4 - core index']
  #allocation1 [shape = 'u32[72,128]{1,0:T(1,128)}', space=vmem, size = 0x9000, scoped, tag = 'internal scratch']
  #allocation2 [shape = 'f32[18,18,3]{2,1,0:T(8,128)}', space=vmem, size = 0x36000, scoped, tag = 'scratch operand']
  %s0 = inlined_call_operand.vmem [shape: f32[2,16,16,3], index: 0, kind: input, shape index: {}]
  %s1 = inlined_call_operand.vmem [shape: f32[2,16,16,3], index: 1, kind: input, shape index: {}]
  %s2 = inlined_call_operand.vmem [shape: f32[2,16,16,3], index: 2, kind: input, shape index: {}]
  %s3 = inlined_call_operand.vmem [shape: f32[27,16], index: 3, kind: input, shape index: {}]
  %s4 = inlined_call_operand.vmem [shape: f32[1,16], index: 4, kind: input, shape index: {}]
  %s5 = inlined_call_operand.hbm [shape: f32[2,16,16,16], index: 5, kind: output, shape index: {}]
  %s6 = sld [smem:[#allocation0]]
  $region53: #{tpu_custom_call.1} parent=0
    _
  %s8 = ssub.s32 1, %s6
  %s9 = scalar_select 0, %s8, %s6
  $region1: #{tpu_custom_call.1} parent=0
    #allocation3 [shape = 'u8[262144]{0}', space=vmem, size = 0x40000, scoped, tag = 'output window, operand 0']
    #allocation4 [shape = 's32[2]{0}', space=sflag, size = 0x8, scoped, tag = 'scoped memory for tpu_custom_call.1']
    %10 = vsyncpa [#allocation4], 0
    %s11 = scalar_lea.sflag [#allocation4], 1
    %12 = vsyncpa %s11, 0
    loop: start=0, step=1, limit=4
    $region2: #{tpu_custom_call.1} parent=1 // loop_pre_header
      _
    $region3: #{tpu_custom_call.1} parent=1 // loop_header
      %s14 = sphi 0, %s18
      %p15 = scmp.ge.s32.totalorder %s14, 4
      %s21 = sphi 0, %s33
      %s22 = sphi 0, %s29
      %s23 = sphi 0, %s21
      %s24 = sphi 0, %s22
      %s25 = sphi 0, %s23
      %s26 = sphi 0, %s24
      %s38 = sphi 0, %s40
      %s41 = sphi 0, %s38
      %s42 = sphi 0, %s41
      %s58 = sphi 0, %s42
      %s74 = sphi 0, %s76
      %s77 = sphi 0, %s74
      %s78 = sphi 0, %s77
      %s94 = sphi 0, %s78
      %s110 = sphi 0, %s112
      %s113 = sphi 0, %s110
      %s114 = sphi 0, %s113
      %s130 = sphi 0, %s114
      %s134 = sphi 0, %s134
      %s136 = sphi 0, %s134
      %s137 = sphi 0, %s136
      %s151 = sphi 0, %s137
      %s155 = sphi 0, %s155
      %s157 = sphi 0, %s155
      %s158 = sphi 0, %s157
      %s172 = sphi 0, %s158
      %s180 = sphi 0, %s182
      %s183 = sphi 0, %s180
      %s184 = sphi 0, %s183
      %s200 = sphi 0, %s184
    $region4: #{tpu_custom_call.1} parent=1 // loop_header_branch
      %17 = sbr.rel (%p15) target = $region8
    $region5: #{tpu_custom_call.1} parent=1 // loop_body
      %s19 = ssub.s32 %s14, 1
      %s20 = ssub.s32 %s14, 2
      %s27 = sadd.s32 1, %s22
      %p28 = scmp.ge.s32.totalorder %s27, 1
      %s29 = scalar_select %p28, 0, %s27
      %s30 = sadd.s32 1, %s21
      %s31 = scalar_select %p28, %s30, %s21
      %p32 = scmp.ge.s32.totalorder %s31, 2
      %s33 = scalar_select %p32, 0, %s31
      %s34 = ssub.s32 %s21, %s33
      %s35 = ssub.s32 %s22, %s29
      %s36 = sor.u32 %s34, %s35
      %p37 = scmp.eq.s32.totalorder %s36, 0
      %s39 = sadd.s32 %s38, 1
      %s40 = scalar_select %p37, %s38, %s39
      %p43 = pneg %p37
      %p44 = scmp.eq.s32.totalorder %s14, 1
      %p45 = por %p43, %p44
      %p46 = scmp.ne.s32.totalorder %s38, %s41
      %p47 = scmp.eq.s32.totalorder %s14, 0
      %p48 = por %p46, %p47
      %p49 = scmp.ne.s32.totalorder %s38, %s41
      %p50 = scmp.eq.s32.totalorder %s19, 1
      %p51 = por %p49, %p50
      %p52 = scmp.ne.s32.totalorder %s41, %s42
      %p53 = scmp.eq.s32.totalorder %s19, 0
      %p54 = por %p52, %p53
      %p55 = scmp.ne.s32.totalorder %s41, %s42
      %p56 = scmp.eq.s32.totalorder %s20, 1
      %p57 = por %p55, %p56
      %p59 = scmp.ne.s32.totalorder %s42, %s58
      %p60 = scmp.eq.s32.totalorder %s20, 0
      %p61 = por %p59, %p60
      %s62 = smul.u32 %s22, 16
      %s63 = ssub.s32 %s62, 1
      %p64 = scmp.gt.s32.totalorder %s63, 0
      %s65 = scalar_select %p64, %s63, 0
      %s66 = smul.u32 %s29, 16
      %s67 = ssub.s32 %s66, 1
      %p68 = scmp.gt.s32.totalorder %s67, 0
      %s69 = scalar_select %p68, %s67, 0
      %s70 = ssub.s32 %s21, %s33
      %s71 = ssub.s32 %s65, %s69
      %s72 = sor.u32 %s70, %s71
      %p73 = scmp.eq.s32.totalorder %s72, 0
      %s75 = sadd.s32 %s74, 1
      %s76 = scalar_select %p73, %s74, %s75
      %p79 = pneg %p73
      %p80 = scmp.eq.s32.totalorder %s14, 1
      %p81 = por %p79, %p80
      %p82 = scmp.ne.s32.totalorder %s74, %s77
      %p83 = scmp.eq.s32.totalorder %s14, 0
      %p84 = por %p82, %p83
      %p85 = scmp.ne.s32.totalorder %s74, %s77
      %p86 = scmp.eq.s32.totalorder %s19, 1
      %p87 = por %p85, %p86
      %p88 = scmp.ne.s32.totalorder %s77, %s78
      %p89 = scmp.eq.s32.totalorder %s19, 0
      %p90 = por %p88, %p89
      %p91 = scmp.ne.s32.totalorder %s77, %s78
      %p92 = scmp.eq.s32.totalorder %s20, 1
      %p93 = por %p91, %p92
      %p95 = scmp.ne.s32.totalorder %s78, %s94
      %p96 = scmp.eq.s32.totalorder %s20, 0
      %p97 = por %p95, %p96
      %s98 = sadd.s32 %s22, 1
      %s99 = smul.u32 %s98, 16
      %p100 = scmp.lt.s32.totalorder %s99, 15
      %s101 = scalar_select %p100, %s99, 15
      %s102 = sadd.s32 %s29, 1
      %s103 = smul.u32 %s102, 16
      %p104 = scmp.lt.s32.totalorder %s103, 15
      %s105 = scalar_select %p104, %s103, 15
      %s106 = ssub.s32 %s21, %s33
      %s107 = ssub.s32 %s101, %s105
      %s108 = sor.u32 %s106, %s107
      %p109 = scmp.eq.s32.totalorder %s108, 0
      %s111 = sadd.s32 %s110, 1
      %s112 = scalar_select %p109, %s110, %s111
      %p115 = pneg %p109
      %p116 = scmp.eq.s32.totalorder %s14, 1
      %p117 = por %p115, %p116
      %p118 = scmp.ne.s32.totalorder %s110, %s113
      %p119 = scmp.eq.s32.totalorder %s14, 0
      %p120 = por %p118, %p119
      %p121 = scmp.ne.s32.totalorder %s110, %s113
      %p122 = scmp.eq.s32.totalorder %s19, 1
      %p123 = por %p121, %p122
      %p124 = scmp.ne.s32.totalorder %s113, %s114
      %p125 = scmp.eq.s32.totalorder %s19, 0
      %p126 = por %p124, %p125
      %p127 = scmp.ne.s32.totalorder %s113, %s114
      %p128 = scmp.eq.s32.totalorder %s20, 1
      %p129 = por %p127, %p128
      %p131 = scmp.ne.s32.totalorder %s114, %s130
      %p132 = scmp.eq.s32.totalorder %s20, 0
      %p133 = por %p131, %p132
      %s135 = sadd.s32 %s134, 1
      %p138 = scmp.eq.s32.totalorder %s14, 1
      %p139 = scmp.ne.s32.totalorder %s134, %s136
      %p140 = scmp.eq.s32.totalorder %s14, 0
      %p141 = por %p139, %p140
      %p142 = scmp.ne.s32.totalorder %s134, %s136
      %p143 = scmp.eq.s32.totalorder %s19, 1
      %p144 = por %p142, %p143
      %p145 = scmp.ne.s32.totalorder %s136, %s137
      %p146 = scmp.eq.s32.totalorder %s19, 0
      %p147 = por %p145, %p146
      %p148 = scmp.ne.s32.totalorder %s136, %s137
      %p149 = scmp.eq.s32.totalorder %s20, 1
      %p150 = por %p148, %p149
      %p152 = scmp.ne.s32.totalorder %s137, %s151
      %p153 = scmp.eq.s32.totalorder %s20, 0
      %p154 = por %p152, %p153
      %s156 = sadd.s32 %s155, 1
      %p159 = scmp.eq.s32.totalorder %s14, 1
      %p160 = scmp.ne.s32.totalorder %s155, %s157
      %p161 = scmp.eq.s32.totalorder %s14, 0
      %p162 = por %p160, %p161
      %p163 = scmp.ne.s32.totalorder %s155, %s157
      %p164 = scmp.eq.s32.totalorder %s19, 1
      %p165 = por %p163, %p164
      %p166 = scmp.ne.s32.totalorder %s157, %s158
      %p167 = scmp.eq.s32.totalorder %s19, 0
      %p168 = por %p166, %p167
      %p169 = scmp.ne.s32.totalorder %s157, %s158
      %p170 = scmp.eq.s32.totalorder %s20, 1
      %p171 = por %p169, %p170
      %p173 = scmp.ne.s32.totalorder %s158, %s172
      %p174 = scmp.eq.s32.totalorder %s20, 0
      %p175 = por %p173, %p174
      %s176 = ssub.s32 %s21, %s33
      %s177 = ssub.s32 %s22, %s29
      %s178 = sor.u32 %s176, %s177
      %p179 = scmp.eq.s32.totalorder %s178, 0
      %s181 = sadd.s32 %s180, 1
      %s182 = scalar_select %p179, %s180, %s181
      %p185 = pneg %p179
      %p186 = scmp.eq.s32.totalorder %s14, 1
      %p187 = por %p185, %p186
      %p188 = scmp.ne.s32.totalorder %s180, %s183
      %p189 = scmp.eq.s32.totalorder %s14, 0
      %p190 = por %p188, %p189
      %p191 = scmp.ne.s32.totalorder %s180, %s183
      %p192 = scmp.eq.s32.totalorder %s19, 1
      %p193 = por %p191, %p192
      %p194 = scmp.ne.s32.totalorder %s183, %s184
      %p195 = scmp.eq.s32.totalorder %s19, 0
      %p196 = por %p194, %p195
      %p197 = scmp.ne.s32.totalorder %s183, %s184
      %p198 = scmp.eq.s32.totalorder %s20, 1
      %p199 = por %p197, %p198
      %p201 = scmp.ne.s32.totalorder %s184, %s200
      %p202 = scmp.eq.s32.totalorder %s20, 0
      %p203 = por %p201, %p202
      %p204 = scmp.le.s32.totalorder 1, %s14
      %p205 = scmp.lt.s32.totalorder %s14, 3
      %p206 = pnand %p204, %p205
      %p207 = pneg %p206
      // Predicated region
      $region9: #{tpu_custom_call.1} parent=5 // pred_check
        _
      $region10: #{tpu_custom_call.1} parent=5 // pred_check_branch
        %209 = sbr.rel (%p206) target = $region12
      $region11: #{tpu_custom_call.1} parent=5 // pred_region
        %s210 = ssub.s32 %s14, 1
        // Predicated region
        $region13: #{tpu_custom_call.1} parent=11 // pred_check
          %p211 = pneg %p147
        $region14: #{tpu_custom_call.1} parent=11 // pred_check_branch
          %213 = sbr.rel (%p211) target = $region16
        $region15: #{tpu_custom_call.1} parent=11 // pred_region
          _
        $region16: #{tpu_custom_call.1} parent=11 // pred_fallthru
          _
        // Predicated region
        $region17: #{tpu_custom_call.1} parent=11 // pred_check
          %p214 = pneg %p168
        $region18: #{tpu_custom_call.1} parent=11 // pred_check_branch
          %216 = sbr.rel (%p214) target = $region20
        $region19: #{tpu_custom_call.1} parent=11 // pred_region
          _
        $region20: #{tpu_custom_call.1} parent=11 // pred_fallthru
          _
      $region12: #{tpu_custom_call.1} parent=5 // pred_fallthru
        _
      %p217 = scmp.lt.s32.totalorder %s14, 2
      // Predicated region
      $region21: #{tpu_custom_call.1} parent=5 // pred_check
        %p218 = pneg %p217
      $region22: #{tpu_custom_call.1} parent=5 // pred_check_branch
        %220 = sbr.rel (%p218) target = $region24
      $region23: #{tpu_custom_call.1} parent=5 // pred_region
        // Predicated region
        $region25: #{tpu_custom_call.1} parent=23 // pred_check
          %p221 = pneg %p48
        $region26: #{tpu_custom_call.1} parent=23 // pred_check_branch
          %223 = sbr.rel (%p221) target = $region28
        $region27: #{tpu_custom_call.1} parent=23 // pred_region
          %s224 = smul.u32 16, %s22
          %p225 = scmp.lt.s32.totalorder %s21, 1
          %s226 = scalar_select %p225, %s21, 1
          %p227 = scmp.lt.s32.totalorder %s224, 15
          %s228 = scalar_select %p227, %s224, 15
          %s229 = smul.addr %s228, 2
          %s230 = smul.addr %s226, 32
          %s231 = sadd.s32 %s229, %s230
          %s232 = smul.addr %s231, 8
          %s233 = scalar_lea.vmem %s0, %s232
          %s234 = smul.u32 16, %s22
        $region28: #{tpu_custom_call.1} parent=23 // pred_fallthru
          _
        // Predicated region
        $region29: #{tpu_custom_call.1} parent=23 // pred_check
          %p235 = pneg %p84
        $region30: #{tpu_custom_call.1} parent=23 // pred_check_branch
          %237 = sbr.rel (%p235) target = $region32
        $region31: #{tpu_custom_call.1} parent=23 // pred_region
          %s238 = smul.u32 %s22, 16
          %s239 = ssub.s32 %s238, 1
          %p240 = scmp.gt.s32.totalorder %s239, 0
          %s241 = scalar_select %p240, %s239, 0
          %p242 = scmp.lt.s32.totalorder %s21, 1
          %s243 = scalar_select %p242, %s21, 1
          %p244 = scmp.lt.s32.totalorder %s241, 15
          %s245 = scalar_select %p244, %s241, 15
          %s246 = smul.addr %s245, 2
          %s247 = smul.addr %s243, 32
          %s248 = sadd.s32 %s246, %s247
          %s249 = smul.addr %s248, 8
          %s250 = scalar_lea.vmem %s1, %s249
          %s251 = smul.u32 %s22, 16
          %s252 = ssub.s32 %s251, 1
          %p253 = scmp.gt.s32.totalorder %s252, 0
          %s254 = scalar_select %p253, %s252, 0
        $region32: #{tpu_custom_call.1} parent=23 // pred_fallthru
          _
        // Predicated region
        $region33: #{tpu_custom_call.1} parent=23 // pred_check
          %p255 = pneg %p120
        $region34: #{tpu_custom_call.1} parent=23 // pred_check_branch
          %257 = sbr.rel (%p255) target = $region36
        $region35: #{tpu_custom_call.1} parent=23 // pred_region
          %s258 = sadd.s32 %s22, 1
          %s259 = smul.u32 %s258, 16
          %p260 = scmp.lt.s32.totalorder %s259, 15
          %s261 = scalar_select %p260, %s259, 15
          %p262 = scmp.lt.s32.totalorder %s21, 1
          %s263 = scalar_select %p262, %s21, 1
          %p264 = scmp.lt.s32.totalorder %s261, 15
          %s265 = scalar_select %p264, %s261, 15
          %s266 = smul.addr %s265, 2
          %s267 = smul.addr %s263, 32
          %s268 = sadd.s32 %s266, %s267
          %s269 = smul.addr %s268, 8
          %s270 = scalar_lea.vmem %s2, %s269
          %s271 = sadd.s32 %s22, 1
          %s272 = smul.u32 %s271, 16
          %p273 = scmp.lt.s32.totalorder %s272, 15
          %s274 = scalar_select %p273, %s272, 15
        $region36: #{tpu_custom_call.1} parent=23 // pred_fallthru
          _
      $region24: #{tpu_custom_call.1} parent=5 // pred_fallthru
        _
      %p275 = scmp.le.s32.totalorder 1, %s14
      %p276 = scmp.lt.s32.totalorder %s14, 3
      %p277 = pnand %p275, %p276
      %p278 = pneg %p277
      // Predicated region
      $region37: #{tpu_custom_call.1} parent=5 // pred_check
        _
      $region38: #{tpu_custom_call.1} parent=5 // pred_check_branch
        %280 = sbr.rel (%p277) target = $region40
      $region39: #{tpu_custom_call.1} parent=5 // pred_region
        %s281 = ssub.s32 %s14, 1
        %s282 = smul.u32 16, %s24
        %p283 = scmp.lt.s32.totalorder %s23, 1
        %s284 = scalar_select %p283, %s23, 1
        %p285 = scmp.lt.s32.totalorder %s282, 15
        %s286 = scalar_select %p285, %s282, 15
        %s287 = smul.addr %s286, 2
        %s288 = smul.addr %s284, 32
        %s289 = sadd.s32 %s287, %s288
        %s290 = smul.addr %s289, 8
        %s291 = scalar_lea.vmem %s0, %s290
        %p292 = pneg %p54
        %p293 = pneg %p51
        %s294 = smul.u32 %s24, 16
        %s295 = ssub.s32 %s294, 1
        %p296 = scmp.gt.s32.totalorder %s295, 0
        %s297 = scalar_select %p296, %s295, 0
        %p298 = scmp.lt.s32.totalorder %s23, 1
        %s299 = scalar_select %p298, %s23, 1
        %p300 = scmp.lt.s32.totalorder %s297, 15
        %s301 = scalar_select %p300, %s297, 15
        %s302 = smul.addr %s301, 2
        %s303 = smul.addr %s299, 32
        %s304 = sadd.s32 %s302, %s303
        %s305 = smul.addr %s304, 8
        %s306 = scalar_lea.vmem %s1, %s305
        %p307 = pneg %p90
        %p308 = pneg %p87
        %s309 = sadd.s32 %s24, 1
        %s310 = smul.u32 %s309, 16
        %p311 = scmp.lt.s32.totalorder %s310, 15
        %s312 = scalar_select %p311, %s310, 15
        %p313 = scmp.lt.s32.totalorder %s23, 1
        %s314 = scalar_select %p313, %s23, 1
        %p315 = scmp.lt.s32.totalorder %s312, 15
        %s316 = scalar_select %p315, %s312, 15
        %s317 = smul.addr %s316, 2
        %s318 = smul.addr %s314, 32
        %s319 = sadd.s32 %s317, %s318
        %s320 = smul.addr %s319, 8
        %s321 = scalar_lea.vmem %s2, %s320
        %p322 = pneg %p126
        %p323 = pneg %p123
        %p324 = pneg %p147
        %p325 = pneg %p144
        %p326 = pneg %p168
        %p327 = pneg %p165
        %p328 = pneg %p196
        %p329 = pneg %p193
        %s330 = sand.u32 %s183, 1
        %s331 = scalar_lea.sflag [#allocation4], %s330
        %s332 = sand.u32 %s183, 1
        %s333 = smul.addr %s332, 256
        %s334 = scalar_lea.vmem [#allocation3], %s333
        %s335 = smul.u32 16, %s24
        %p336 = scmp.lt.s32.totalorder %s23, 1
        %s337 = scalar_select %p336, %s23, 1
        %p338 = scmp.lt.s32.totalorder %s335, 15
        %s339 = scalar_select %p338, %s335, 15
        %s340 = smul.addr %s339, 2
        %s341 = smul.addr %s337, 32
        %s342 = sadd.s32 %s340, %s341
        %s343 = smul.addr %s342, 8
        %s344 = scalar_lea.vmem %s0, %s343
        %s345 = smul.u32 16, %s24
        %s346 = smul.u32 %s24, 16
        %s347 = ssub.s32 %s346, 1
        %p348 = scmp.gt.s32.totalorder %s347, 0
        %s349 = scalar_select %p348, %s347, 0
        %p350 = scmp.lt.s32.totalorder %s23, 1
        %s351 = scalar_select %p350, %s23, 1
        %p352 = scmp.lt.s32.totalorder %s349, 15
        %s353 = scalar_select %p352, %s349, 15
        %s354 = smul.addr %s353, 2
        %s355 = smul.addr %s351, 32
        %s356 = sadd.s32 %s354, %s355
        %s357 = smul.addr %s356, 8
        %s358 = scalar_lea.vmem %s1, %s357
        %s359 = smul.u32 %s24, 16
        %s360 = ssub.s32 %s359, 1
        %p361 = scmp.gt.s32.totalorder %s360, 0
        %s362 = scalar_select %p361, %s360, 0
        %s363 = sadd.s32 %s24, 1
        %s364 = smul.u32 %s363, 16
        %p365 = scmp.lt.s32.totalorder %s364, 15
        %s366 = scalar_select %p365, %s364, 15
        %p367 = scmp.lt.s32.totalorder %s23, 1
        %s368 = scalar_select %p367, %s23, 1
        %p369 = scmp.lt.s32.totalorder %s366, 15
        %s370 = scalar_select %p369, %s366, 15
        %s371 = smul.addr %s370, 2
        %s372 = smul.addr %s368, 32
        %s373 = sadd.s32 %s371, %s372
        %s374 = smul.addr %s373, 8
        %s375 = scalar_lea.vmem %s2, %s374
        %s376 = sadd.s32 %s24, 1
        %s377 = smul.u32 %s376, 16
        %p378 = scmp.lt.s32.totalorder %s377, 15
        %s379 = scalar_select %p378, %s377, 15
        %s380 = smul.u32 16, %s24
        %vm381 = vcmask 16384
        %382 = vst.msk [vmem:[#allocation2] sm:$0x1] %vm381, 0.0
        %383 = vst.msk [vmem:[#allocation2 + $0x18] sm:$0x1] %vm381, 0.0
        %384 = vst.msk [vmem:[#allocation2 + $0x30] sm:$0x1] %vm381, 0.0
        %385 = vst.msk [vmem:[#allocation2 + $0x48] sm:$0x1] %vm381, 0.0
        %386 = vst.msk [vmem:[#allocation2 + $0x60] sm:$0x1] %vm381, 0.0
        %387 = vst.msk [vmem:[#allocation2 + $0x78] sm:$0x1] %vm381, 0.0
        %388 = vst.msk [vmem:[#allocation2 + $0x90] sm:$0x1] %vm381, 0.0
        %389 = vst.msk [vmem:[#allocation2 + $0xa8] sm:$0x1] %vm381, 0.0
        %390 = vst.msk [vmem:[#allocation2 + $0xc0] sm:$0x1] %vm381, 0.0
        %391 = vst.msk [vmem:[#allocation2 + $0xd8] sm:$0x1] %vm381, 0.0
        %392 = vst.msk [vmem:[#allocation2 + $0xf0] sm:$0x1] %vm381, 0.0
        %393 = vst.msk [vmem:[#allocation2 + $0x108] sm:$0x1] %vm381, 0.0
        %394 = vst.msk [vmem:[#allocation2 + $0x120] sm:$0x1] %vm381, 0.0
        %395 = vst.msk [vmem:[#allocation2 + $0x138] sm:$0x1] %vm381, 0.0
        %396 = vst.msk [vmem:[#allocation2 + $0x150] sm:$0x1] %vm381, 0.0
        %397 = vst.msk [vmem:[#allocation2 + $0x168] sm:$0x1] %vm381, 0.0
        %398 = vst.msk [vmem:[#allocation2 + $0x180] sm:$0x1] %vm381, 0.0
        %399 = vst.msk [vmem:[#allocation2 + $0x198] sm:$0x1] %vm381, 0.0
        %400 = vst.msk [vmem:[#allocation2 + $0x11] sm:$0x1] %vm381, 0.0
        %401 = vst.msk [vmem:[#allocation2 + $0x29] sm:$0x1] %vm381, 0.0
        %402 = vst.msk [vmem:[#allocation2 + $0x41] sm:$0x1] %vm381, 0.0
        %403 = vst.msk [vmem:[#allocation2 + $0x59] sm:$0x1] %vm381, 0.0
        %404 = vst.msk [vmem:[#allocation2 + $0x71] sm:$0x1] %vm381, 0.0
        %405 = vst.msk [vmem:[#allocation2 + $0x89] sm:$0x1] %vm381, 0.0
        %406 = vst.msk [vmem:[#allocation2 + $0xa1] sm:$0x1] %vm381, 0.0
        %407 = vst.msk [vmem:[#allocation2 + $0xb9] sm:$0x1] %vm381, 0.0
        %408 = vst.msk [vmem:[#allocation2 + $0xd1] sm:$0x1] %vm381, 0.0
        %409 = vst.msk [vmem:[#allocation2 + $0xe9] sm:$0x1] %vm381, 0.0
        %410 = vst.msk [vmem:[#allocation2 + $0x101] sm:$0x1] %vm381, 0.0
        %411 = vst.msk [vmem:[#allocation2 + $0x119] sm:$0x1] %vm381, 0.0
        %412 = vst.msk [vmem:[#allocation2 + $0x131] sm:$0x1] %vm381, 0.0
        %413 = vst.msk [vmem:[#allocation2 + $0x149] sm:$0x1] %vm381, 0.0
        %414 = vst.msk [vmem:[#allocation2 + $0x161] sm:$0x1] %vm381, 0.0
        %415 = vst.msk [vmem:[#allocation2 + $0x179] sm:$0x1] %vm381, 0.0
        %416 = vst.msk [vmem:[#allocation2 + $0x191] sm:$0x1] %vm381, 0.0
        %417 = vst.msk [vmem:[#allocation2 + $0x1a9] sm:$0x1] %vm381, 0.0
        %v418 = vld [vmem:[%s344] sm:$0xff]
        %v419 = vld [vmem:[%s344 + $0x8] sm:$0xff]
        %v420 = vld [vmem:[%s344 + $0x10] sm:$0xff]
        %v421 = vld [vmem:[%s344 + $0x18] sm:$0xff]
        %v422 = vld [vmem:[%s344 + $0x20] sm:$0xff]
        %v423 = vld [vmem:[%s344 + $0x28] sm:$0xff]
        %v424 = vld [vmem:[%s344 + $0x30] sm:$0xff]
        %v425 = vld [vmem:[%s344 + $0x38] sm:$0xff]
        %v426 = vld [vmem:[%s344 + $0x40] sm:$0xff]
        %v427 = vld [vmem:[%s344 + $0x48] sm:$0xff]
        %v428 = vld [vmem:[%s344 + $0x50] sm:$0xff]
        %v429 = vld [vmem:[%s344 + $0x58] sm:$0xff]
        %v430 = vld [vmem:[%s344 + $0x60] sm:$0xff]
        %v431 = vld [vmem:[%s344 + $0x68] sm:$0xff]
        %v432 = vld [vmem:[%s344 + $0x70] sm:$0xff]
        %v433 = vld [vmem:[%s344 + $0x78] sm:$0xff]
        %v434 = vld [vmem:[%s344 + $0x80] sm:$0xff]
        %v435 = vld [vmem:[%s344 + $0x88] sm:$0xff]
        %v436 = vld [vmem:[%s344 + $0x90] sm:$0xff]
        %v437 = vld [vmem:[%s344 + $0x98] sm:$0xff]
        %v438 = vld [vmem:[%s344 + $0xa0] sm:$0xff]
        %v439 = vld [vmem:[%s344 + $0xa8] sm:$0xff]
        %v440 = vld [vmem:[%s344 + $0xb0] sm:$0xff]
        %v441 = vld [vmem:[%s344 + $0xb8] sm:$0xff]
        %v442 = vld [vmem:[%s344 + $0xc0] sm:$0xff]
        %v443 = vld [vmem:[%s344 + $0xc8] sm:$0xff]
        %v444 = vld [vmem:[%s344 + $0xd0] sm:$0xff]
        %v445 = vld [vmem:[%s344 + $0xd8] sm:$0xff]
        %v446 = vld [vmem:[%s344 + $0xe0] sm:$0xff]
        %v447 = vld [vmem:[%s344 + $0xe8] sm:$0xff]
        %v448 = vld [vmem:[%s344 + $0xf0] sm:$0xff]
        %v449 = vld [vmem:[%s344 + $0xf8] sm:$0xff]
        %s450 = scalar_lea.vmem [#allocation2], 24
        %vm451 = vcmask 23552
        %452 = vst.msk [vmem:[%s450 + $0x1] sm:$0xff] %vm451, %v418
        %453 = vst.msk [vmem:[%s450 + $0x9] sm:$0xff] %vm451, %v419
        %454 = vst.msk [vmem:[%s450 + $0x19] sm:$0xff] %vm451, %v420
        %455 = vst.msk [vmem:[%s450 + $0x21] sm:$0xff] %vm451, %v421
        %456 = vst.msk [vmem:[%s450 + $0x31] sm:$0xff] %vm451, %v422
        %457 = vst.msk [vmem:[%s450 + $0x39] sm:$0xff] %vm451, %v423
        %458 = vst.msk [vmem:[%s450 + $0x49] sm:$0xff] %vm451, %v424
        %459 = vst.msk [vmem:[%s450 + $0x51] sm:$0xff] %vm451, %v425
        %460 = vst.msk [vmem:[%s450 + $0x61] sm:$0xff] %vm451, %v426
        %461 = vst.msk [vmem:[%s450 + $0x69] sm:$0xff] %vm451, %v427
        %462 = vst.msk [vmem:[%s450 + $0x79] sm:$0xff] %vm451, %v428
        %463 = vst.msk [vmem:[%s450 + $0x81] sm:$0xff] %vm451, %v429
        %464 = vst.msk [vmem:[%s450 + $0x91] sm:$0xff] %vm451, %v430
        %465 = vst.msk [vmem:[%s450 + $0x99] sm:$0xff] %vm451, %v431
        %466 = vst.msk [vmem:[%s450 + $0xa9] sm:$0xff] %vm451, %v432
        %467 = vst.msk [vmem:[%s450 + $0xb1] sm:$0xff] %vm451, %v433
        %468 = vst.msk [vmem:[%s450 + $0xc1] sm:$0xff] %vm451, %v434
        %469 = vst.msk [vmem:[%s450 + $0xc9] sm:$0xff] %vm451, %v435
        %470 = vst.msk [vmem:[%s450 + $0xd9] sm:$0xff] %vm451, %v436
        %471 = vst.msk [vmem:[%s450 + $0xe1] sm:$0xff] %vm451, %v437
        %472 = vst.msk [vmem:[%s450 + $0xf1] sm:$0xff] %vm451, %v438
        %473 = vst.msk [vmem:[%s450 + $0xf9] sm:$0xff] %vm451, %v439
        %474 = vst.msk [vmem:[%s450 + $0x109] sm:$0xff] %vm451, %v440
        %475 = vst.msk [vmem:[%s450 + $0x111] sm:$0xff] %vm451, %v441
        %476 = vst.msk [vmem:[%s450 + $0x121] sm:$0xff] %vm451, %v442
        %477 = vst.msk [vmem:[%s450 + $0x129] sm:$0xff] %vm451, %v443
        %478 = vst.msk [vmem:[%s450 + $0x139] sm:$0xff] %vm451, %v444
        %479 = vst.msk [vmem:[%s450 + $0x141] sm:$0xff] %vm451, %v445
        %480 = vst.msk [vmem:[%s450 + $0x151] sm:$0xff] %vm451, %v446
        %481 = vst.msk [vmem:[%s450 + $0x159] sm:$0xff] %vm451, %v447
        %482 = vst.msk [vmem:[%s450 + $0x169] sm:$0xff] %vm451, %v448
        %483 = vst.msk [vmem:[%s450 + $0x171] sm:$0xff] %vm451, %v449
        %p484 = scmp.gt.s32.totalorder %s24, 0
        %s485 = scalar_select %p484, 1, 0
        %s486 = scvt.s32.f32 %s485
        %v487 = vld [vmem:[%s358] sm:$0xff]
        %v488 = vld [vmem:[%s358 + $0x8] sm:$0xff]
        %v489 = vstv %s486
        %v490 = vmul.f32 %v487, %v489
        %v491 = vmul.f32 %v488, %v489
        %492 = vst.msk [vmem:[#allocation2 + $0x1] sm:$0xff] %vm451, %v490
        %493 = vst.msk [vmem:[#allocation2 + $0x9] sm:$0xff] %vm451, %v491
        %p494 = scmp.lt.s32.totalorder %s24, 0
        %s495 = scalar_select %p494, 1, 0
        %s496 = scvt.s32.f32 %s495
        %v497 = vld [vmem:[%s375] sm:$0xff]
        %v498 = vld [vmem:[%s375 + $0x8] sm:$0xff]
        %v499 = vstv %s496
        %v500 = vmul.f32 %v497, %v499
        %v501 = vmul.f32 %v498, %v499
        %s502 = scalar_lea.vmem [#allocation2], 408
        %503 = vst.msk [vmem:[%s502 + $0x1] sm:$0xff] %vm451, %v500
        %504 = vst.msk [vmem:[%s502 + $0x9] sm:$0xff] %vm451, %v501
        %v505 = vld [vmem:[#allocation2] sm:$0xff]
        %v506 = vld [vmem:[#allocation2 + $0x8] sm:$0xff]
        %v507 = vld [vmem:[#allocation2 + $0x18] sm:$0xff]
        %v508 = vld [vmem:[#allocation2 + $0x20] sm:$0xff]
        %v509 = vld [vmem:[#allocation2 + $0x30] sm:$0xff]
        %v510 = vld [vmem:[#allocation2 + $0x38] sm:$0xff]
        %v511 = vld [vmem:[#allocation2 + $0x48] sm:$0xff]
        %v512 = vld [vmem:[#allocation2 + $0x50] sm:$0xff]
        %v513 = vld [vmem:[#allocation2 + $0x60] sm:$0xff]
        %v514 = vld [vmem:[#allocation2 + $0x68] sm:$0xff]
        %v515 = vld [vmem:[#allocation2 + $0x78] sm:$0xff]
        %v516 = vld [vmem:[#allocation2 + $0x80] sm:$0xff]
        %v517 = vld [vmem:[#allocation2 + $0x90] sm:$0xff]
        %v518 = vld [vmem:[#allocation2 + $0x98] sm:$0xff]
        %v519 = vld [vmem:[#allocation2 + $0xa8] sm:$0xff]
        %v520 = vld [vmem:[#allocation2 + $0xb0] sm:$0xff]
        %v521 = vld [vmem:[#allocation2 + $0xc0] sm:$0xff]
        %v522 = vld [vmem:[#allocation2 + $0xc8] sm:$0xff]
        %v523 = vld [vmem:[#allocation2 + $0xd8] sm:$0xff]
        %v524 = vld [vmem:[#allocation2 + $0xe0] sm:$0xff]
        %v525 = vld [vmem:[#allocation2 + $0xf0] sm:$0xff]
        %v526 = vld [vmem:[#allocation2 + $0xf8] sm:$0xff]
        %v527 = vld [vmem:[#allocation2 + $0x108] sm:$0xff]
        %v528 = vld [vmem:[#allocation2 + $0x110] sm:$0xff]
        %v529 = vld [vmem:[#allocation2 + $0x120] sm:$0xff]
        %v530 = vld [vmem:[#allocation2 + $0x128] sm:$0xff]
        %v531 = vld [vmem:[#allocation2 + $0x138] sm:$0xff]
        %v532 = vld [vmem:[#allocation2 + $0x140] sm:$0xff]
        %v533 = vld [vmem:[#allocation2 + $0x150] sm:$0xff]
        %v534 = vld [vmem:[#allocation2 + $0x158] sm:$0xff]
        %v535 = vld [vmem:[#allocation2 + $0x168] sm:$0xff]
        %v536 = vld [vmem:[#allocation2 + $0x170] sm:$0xff]
        %v537 = vld [vmem:[#allocation2 + $0x1] sm:$0xff]
        %v538 = vld [vmem:[#allocation2 + $0x9] sm:$0xff]
        %v539 = vld [vmem:[#allocation2 + $0x19] sm:$0xff]
        %v540 = vld [vmem:[#allocation2 + $0x21] sm:$0xff]
        %v541 = vld [vmem:[#allocation2 + $0x31] sm:$0xff]
        %v542 = vld [vmem:[#allocation2 + $0x39] sm:$0xff]
        %v543 = vld [vmem:[#allocation2 + $0x49] sm:$0xff]
        %v544 = vld [vmem:[#allocation2 + $0x51] sm:$0xff]
        %v545 = vld [vmem:[#allocation2 + $0x61] sm:$0xff]
        %v546 = vld [vmem:[#allocation2 + $0x69] sm:$0xff]
        %v547 = vld [vmem:[#allocation2 + $0x79] sm:$0xff]
        %v548 = vld [vmem:[#allocation2 + $0x81] sm:$0xff]
        %v549 = vld [vmem:[#allocation2 + $0x91] sm:$0xff]
        %v550 = vld [vmem:[#allocation2 + $0x99] sm:$0xff]
        %v551 = vld [vmem:[#allocation2 + $0xa9] sm:$0xff]
        %v552 = vld [vmem:[#allocation2 + $0xb1] sm:$0xff]
        %v553 = vld [vmem:[#allocation2 + $0xc1] sm:$0xff]
        %v554 = vld [vmem:[#allocation2 + $0xc9] sm:$0xff]
        %v555 = vld [vmem:[#allocation2 + $0xd9] sm:$0xff]
        %v556 = vld [vmem:[#allocation2 + $0xe1] sm:$0xff]
        %v557 = vld [vmem:[#allocation2 + $0xf1] sm:$0xff]
        %v558 = vld [vmem:[#allocation2 + $0xf9] sm:$0xff]
        %v559 = vld [vmem:[#allocation2 + $0x109] sm:$0xff]
        %v560 = vld [vmem:[#allocation2 + $0x111] sm:$0xff]
        %v561 = vld [vmem:[#allocation2 + $0x121] sm:$0xff]
        %v562 = vld [vmem:[#allocation2 + $0x129] sm:$0xff]
        %v563 = vld [vmem:[#allocation2 + $0x139] sm:$0xff]
        %v564 = vld [vmem:[#allocation2 + $0x141] sm:$0xff]
        %v565 = vld [vmem:[#allocation2 + $0x151] sm:$0xff]
        %v566 = vld [vmem:[#allocation2 + $0x159] sm:$0xff]
        %v567 = vld [vmem:[#allocation2 + $0x169] sm:$0xff]
        %v568 = vld [vmem:[#allocation2 + $0x171] sm:$0xff]
        %v569 = vld [vmem:[#allocation2 + $0x2] sm:$0xff]
        %v570 = vld [vmem:[#allocation2 + $0xa] sm:$0xff]
        %v571 = vld [vmem:[#allocation2 + $0x1a] sm:$0xff]
        %v572 = vld [vmem:[#allocation2 + $0x22] sm:$0xff]
        %v573 = vld [vmem:[#allocation2 + $0x32] sm:$0xff]
        %v574 = vld [vmem:[#allocation2 + $0x3a] sm:$0xff]
        %v575 = vld [vmem:[#allocation2 + $0x4a] sm:$0xff]
        %v576 = vld [vmem:[#allocation2 + $0x52] sm:$0xff]
        %v577 = vld [vmem:[#allocation2 + $0x62] sm:$0xff]
        %v578 = vld [vmem:[#allocation2 + $0x6a] sm:$0xff]
        %v579 = vld [vmem:[#allocation2 + $0x7a] sm:$0xff]
        %v580 = vld [vmem:[#allocation2 + $0x82] sm:$0xff]
        %v581 = vld [vmem:[#allocation2 + $0x92] sm:$0xff]
        %v582 = vld [vmem:[#allocation2 + $0x9a] sm:$0xff]
        %v583 = vld [vmem:[#allocation2 + $0xaa] sm:$0xff]
        %v584 = vld [vmem:[#allocation2 + $0xb2] sm:$0xff]
        %v585 = vld [vmem:[#allocation2 + $0xc2] sm:$0xff]
        %v586 = vld [vmem:[#allocation2 + $0xca] sm:$0xff]
        %v587 = vld [vmem:[#allocation2 + $0xda] sm:$0xff]
        %v588 = vld [vmem:[#allocation2 + $0xe2] sm:$0xff]
        %v589 = vld [vmem:[#allocation2 + $0xf2] sm:$0xff]
        %v590 = vld [vmem:[#allocation2 + $0xfa] sm:$0xff]
        %v591 = vld [vmem:[#allocation2 + $0x10a] sm:$0xff]
        %v592 = vld [vmem:[#allocation2 + $0x112] sm:$0xff]
        %v593 = vld [vmem:[#allocation2 + $0x122] sm:$0xff]
        %v594 = vld [vmem:[#allocation2 + $0x12a] sm:$0xff]
        %v595 = vld [vmem:[#allocation2 + $0x13a] sm:$0xff]
        %v596 = vld [vmem:[#allocation2 + $0x142] sm:$0xff]
        %v597 = vld [vmem:[#allocation2 + $0x152] sm:$0xff]
        %v598 = vld [vmem:[#allocation2 + $0x15a] sm:$0xff]
        %v599 = vld [vmem:[#allocation2 + $0x16a] sm:$0xff]
        %v600 = vld [vmem:[#allocation2 + $0x172] sm:$0xff]
        %v601 = vld [vmem:[%s450] sm:$0xff]
        %v602 = vld [vmem:[%s450 + $0x8] sm:$0xff]
        %v603 = vld [vmem:[%s450 + $0x18] sm:$0xff]
        %v604 = vld [vmem:[%s450 + $0x20] sm:$0xff]
        %v605 = vld [vmem:[%s450 + $0x30] sm:$0xff]
        %v606 = vld [vmem:[%s450 + $0x38] sm:$0xff]
        %v607 = vld [vmem:[%s450 + $0x48] sm:$0xff]
        %v608 = vld [vmem:[%s450 + $0x50] sm:$0xff]
        %v609 = vld [vmem:[%s450 + $0x60] sm:$0xff]
        %v610 = vld [vmem:[%s450 + $0x68] sm:$0xff]
        %v611 = vld [vmem:[%s450 + $0x78] sm:$0xff]
        %v612 = vld [vmem:[%s450 + $0x80] sm:$0xff]
        %v613 = vld [vmem:[%s450 + $0x90] sm:$0xff]
        %v614 = vld [vmem:[%s450 + $0x98] sm:$0xff]
        %v615 = vld [vmem:[%s450 + $0xa8] sm:$0xff]
        %v616 = vld [vmem:[%s450 + $0xb0] sm:$0xff]
        %v617 = vld [vmem:[%s450 + $0xc0] sm:$0xff]
        %v618 = vld [vmem:[%s450 + $0xc8] sm:$0xff]
        %v619 = vld [vmem:[%s450 + $0xd8] sm:$0xff]
        %v620 = vld [vmem:[%s450 + $0xe0] sm:$0xff]
        %v621 = vld [vmem:[%s450 + $0xf0] sm:$0xff]
        %v622 = vld [vmem:[%s450 + $0xf8] sm:$0xff]
        %v623 = vld [vmem:[%s450 + $0x108] sm:$0xff]
        %v624 = vld [vmem:[%s450 + $0x110] sm:$0xff]
        %v625 = vld [vmem:[%s450 + $0x120] sm:$0xff]
        %v626 = vld [vmem:[%s450 + $0x128] sm:$0xff]
        %v627 = vld [vmem:[%s450 + $0x138] sm:$0xff]
        %v628 = vld [vmem:[%s450 + $0x140] sm:$0xff]
        %v629 = vld [vmem:[%s450 + $0x150] sm:$0xff]
        %v630 = vld [vmem:[%s450 + $0x158] sm:$0xff]
        %v631 = vld [vmem:[%s450 + $0x168] sm:$0xff]
        %v632 = vld [vmem:[%s450 + $0x170] sm:$0xff]
        %v633 = vld [vmem:[%s450 + $0x1] sm:$0xff]
        %v634 = vld [vmem:[%s450 + $0x9] sm:$0xff]
        %v635 = vld [vmem:[%s450 + $0x19] sm:$0xff]
        %v636 = vld [vmem:[%s450 + $0x21] sm:$0xff]
        %v637 = vld [vmem:[%s450 + $0x31] sm:$0xff]
        %v638 = vld [vmem:[%s450 + $0x39] sm:$0xff]
        %v639 = vld [vmem:[%s450 + $0x49] sm:$0xff]
        %v640 = vld [vmem:[%s450 + $0x51] sm:$0xff]
        %v641 = vld [vmem:[%s450 + $0x61] sm:$0xff]
        %v642 = vld [vmem:[%s450 + $0x69] sm:$0xff]
        %v643 = vld [vmem:[%s450 + $0x79] sm:$0xff]
        %v644 = vld [vmem:[%s450 + $0x81] sm:$0xff]
        %v645 = vld [vmem:[%s450 + $0x91] sm:$0xff]
        %v646 = vld [vmem:[%s450 + $0x99] sm:$0xff]
        %v647 = vld [vmem:[%s450 + $0xa9] sm:$0xff]
        %v648 = vld [vmem:[%s450 + $0xb1] sm:$0xff]
        %v649 = vld [vmem:[%s450 + $0xc1] sm:$0xff]
        %v650 = vld [vmem:[%s450 + $0xc9] sm:$0xff]
        %v651 = vld [vmem:[%s450 + $0xd9] sm:$0xff]
        %v652 = vld [vmem:[%s450 + $0xe1] sm:$0xff]
        %v653 = vld [vmem:[%s450 + $0xf1] sm:$0xff]
        %v654 = vld [vmem:[%s450 + $0xf9] sm:$0xff]
        %v655 = vld [vmem:[%s450 + $0x109] sm:$0xff]
        %v656 = vld [vmem:[%s450 + $0x111] sm:$0xff]
        %v657 = vld [vmem:[%s450 + $0x121] sm:$0xff]
        %v658 = vld [vmem:[%s450 + $0x129] sm:$0xff]
        %v659 = vld [vmem:[%s450 + $0x139] sm:$0xff]
        %v660 = vld [vmem:[%s450 + $0x141] sm:$0xff]
        %v661 = vld [vmem:[%s450 + $0x151] sm:$0xff]
        %v662 = vld [vmem:[%s450 + $0x159] sm:$0xff]
        %v663 = vld [vmem:[%s450 + $0x169] sm:$0xff]
        %v664 = vld [vmem:[%s450 + $0x171] sm:$0xff]
        %v665 = vld [vmem:[%s450 + $0x2] sm:$0xff]
        %v666 = vld [vmem:[%s450 + $0xa] sm:$0xff]
        %v667 = vld [vmem:[%s450 + $0x1a] sm:$0xff]
        %v668 = vld [vmem:[%s450 + $0x22] sm:$0xff]
        %v669 = vld [vmem:[%s450 + $0x32] sm:$0xff]
        %v670 = vld [vmem:[%s450 + $0x3a] sm:$0xff]
        %v671 = vld [vmem:[%s450 + $0x4a] sm:$0xff]
        %v672 = vld [vmem:[%s450 + $0x52] sm:$0xff]
        %v673 = vld [vmem:[%s450 + $0x62] sm:$0xff]
        %v674 = vld [vmem:[%s450 + $0x6a] sm:$0xff]
        %v675 = vld [vmem:[%s450 + $0x7a] sm:$0xff]
        %v676 = vld [vmem:[%s450 + $0x82] sm:$0xff]
        %v677 = vld [vmem:[%s450 + $0x92] sm:$0xff]
        %v678 = vld [vmem:[%s450 + $0x9a] sm:$0xff]
        %v679 = vld [vmem:[%s450 + $0xaa] sm:$0xff]
        %v680 = vld [vmem:[%s450 + $0xb2] sm:$0xff]
        %v681 = vld [vmem:[%s450 + $0xc2] sm:$0xff]
        %v682 = vld [vmem:[%s450 + $0xca] sm:$0xff]
        %v683 = vld [vmem:[%s450 + $0xda] sm:$0xff]
        %v684 = vld [vmem:[%s450 + $0xe2] sm:$0xff]
        %v685 = vld [vmem:[%s450 + $0xf2] sm:$0xff]
        %v686 = vld [vmem:[%s450 + $0xfa] sm:$0xff]
        %v687 = vld [vmem:[%s450 + $0x10a] sm:$0xff]
        %v688 = vld [vmem:[%s450 + $0x112] sm:$0xff]
        %v689 = vld [vmem:[%s450 + $0x122] sm:$0xff]
        %v690 = vld [vmem:[%s450 + $0x12a] sm:$0xff]
        %v691 = vld [vmem:[%s450 + $0x13a] sm:$0xff]
        %v692 = vld [vmem:[%s450 + $0x142] sm:$0xff]
        %v693 = vld [vmem:[%s450 + $0x152] sm:$0xff]
        %v694 = vld [vmem:[%s450 + $0x15a] sm:$0xff]
        %v695 = vld [vmem:[%s450 + $0x16a] sm:$0xff]
        %v696 = vld [vmem:[%s450 + $0x172] sm:$0xff]
        %s697 = scalar_lea.vmem [#allocation2], 48
        %v698 = vld [vmem:[%s697] sm:$0xff]
        %v699 = vld [vmem:[%s697 + $0x8] sm:$0xff]
        %v700 = vld [vmem:[%s697 + $0x18] sm:$0xff]
        %v701 = vld [vmem:[%s697 + $0x20] sm:$0xff]
        %v702 = vld [vmem:[%s697 + $0x30] sm:$0xff]
        %v703 = vld [vmem:[%s697 + $0x38] sm:$0xff]
        %v704 = vld [vmem:[%s697 + $0x48] sm:$0xff]
        %v705 = vld [vmem:[%s697 + $0x50] sm:$0xff]
        %v706 = vld [vmem:[%s697 + $0x60] sm:$0xff]
        %v707 = vld [vmem:[%s697 + $0x68] sm:$0xff]
        %v708 = vld [vmem:[%s697 + $0x78] sm:$0xff]
        %v709 = vld [vmem:[%s697 + $0x80] sm:$0xff]
        %v710 = vld [vmem:[%s697 + $0x90] sm:$0xff]
        %v711 = vld [vmem:[%s697 + $0x98] sm:$0xff]
        %v712 = vld [vmem:[%s697 + $0xa8] sm:$0xff]
        %v713 = vld [vmem:[%s697 + $0xb0] sm:$0xff]
        %v714 = vld [vmem:[%s697 + $0xc0] sm:$0xff]
        %v715 = vld [vmem:[%s697 + $0xc8] sm:$0xff]
        %v716 = vld [vmem:[%s697 + $0xd8] sm:$0xff]
        %v717 = vld [vmem:[%s697 + $0xe0] sm:$0xff]
        %v718 = vld [vmem:[%s697 + $0xf0] sm:$0xff]
        %v719 = vld [vmem:[%s697 + $0xf8] sm:$0xff]
        %v720 = vld [vmem:[%s697 + $0x108] sm:$0xff]
        %v721 = vld [vmem:[%s697 + $0x110] sm:$0xff]
        %v722 = vld [vmem:[%s697 + $0x120] sm:$0xff]
        %v723 = vld [vmem:[%s697 + $0x128] sm:$0xff]
        %v724 = vld [vmem:[%s697 + $0x138] sm:$0xff]
        %v725 = vld [vmem:[%s697 + $0x140] sm:$0xff]
        %v726 = vld [vmem:[%s697 + $0x150] sm:$0xff]
        %v727 = vld [vmem:[%s697 + $0x158] sm:$0xff]
        %v728 = vld [vmem:[%s697 + $0x168] sm:$0xff]
        %v729 = vld [vmem:[%s697 + $0x170] sm:$0xff]
        %v730 = vld [vmem:[%s697 + $0x1] sm:$0xff]
        %v731 = vld [vmem:[%s697 + $0x9] sm:$0xff]
        %v732 = vld [vmem:[%s697 + $0x19] sm:$0xff]
        %v733 = vld [vmem:[%s697 + $0x21] sm:$0xff]
        %v734 = vld [vmem:[%s697 + $0x31] sm:$0xff]
        %v735 = vld [vmem:[%s697 + $0x39] sm:$0xff]
        %v736 = vld [vmem:[%s697 + $0x49] sm:$0xff]
        %v737 = vld [vmem:[%s697 + $0x51] sm:$0xff]
        %v738 = vld [vmem:[%s697 + $0x61] sm:$0xff]
        %v739 = vld [vmem:[%s697 + $0x69] sm:$0xff]
        %v740 = vld [vmem:[%s697 + $0x79] sm:$0xff]
        %v741 = vld [vmem:[%s697 + $0x81] sm:$0xff]
        %v742 = vld [vmem:[%s697 + $0x91] sm:$0xff]
        %v743 = vld [vmem:[%s697 + $0x99] sm:$0xff]
        %v744 = vld [vmem:[%s697 + $0xa9] sm:$0xff]
        %v745 = vld [vmem:[%s697 + $0xb1] sm:$0xff]
        %v746 = vld [vmem:[%s697 + $0xc1] sm:$0xff]
        %v747 = vld [vmem:[%s697 + $0xc9] sm:$0xff]
        %v748 = vld [vmem:[%s697 + $0xd9] sm:$0xff]
        %v749 = vld [vmem:[%s697 + $0xe1] sm:$0xff]
        %v750 = vld [vmem:[%s697 + $0xf1] sm:$0xff]
        %v751 = vld [vmem:[%s697 + $0xf9] sm:$0xff]
        %v752 = vld [vmem:[%s697 + $0x109] sm:$0xff]
        %v753 = vld [vmem:[%s697 + $0x111] sm:$0xff]
        %v754 = vld [vmem:[%s697 + $0x121] sm:$0xff]
        %v755 = vld [vmem:[%s697 + $0x129] sm:$0xff]
        %v756 = vld [vmem:[%s697 + $0x139] sm:$0xff]
        %v757 = vld [vmem:[%s697 + $0x141] sm:$0xff]
        %v758 = vld [vmem:[%s697 + $0x151] sm:$0xff]
        %v759 = vld [vmem:[%s697 + $0x159] sm:$0xff]
        %v760 = vld [vmem:[%s697 + $0x169] sm:$0xff]
        %v761 = vld [vmem:[%s697 + $0x171] sm:$0xff]
        %v762 = vld [vmem:[%s697 + $0x2] sm:$0xff]
        %v763 = vld [vmem:[%s697 + $0xa] sm:$0xff]
        %v764 = vld [vmem:[%s697 + $0x1a] sm:$0xff]
        %v765 = vld [vmem:[%s697 + $0x22] sm:$0xff]
        %v766 = vld [vmem:[%s697 + $0x32] sm:$0xff]
        %v767 = vld [vmem:[%s697 + $0x3a] sm:$0xff]
        %v768 = vld [vmem:[%s697 + $0x4a] sm:$0xff]
        %v769 = vld [vmem:[%s697 + $0x52] sm:$0xff]
        %v770 = vld [vmem:[%s697 + $0x62] sm:$0xff]
        %v771 = vld [vmem:[%s697 + $0x6a] sm:$0xff]
        %v772 = vld [vmem:[%s697 + $0x7a] sm:$0xff]
        %v773 = vld [vmem:[%s697 + $0x82] sm:$0xff]
        %v774 = vld [vmem:[%s697 + $0x92] sm:$0xff]
        %v775 = vld [vmem:[%s697 + $0x9a] sm:$0xff]
        %v776 = vld [vmem:[%s697 + $0xaa] sm:$0xff]
        %v777 = vld [vmem:[%s697 + $0xb2] sm:$0xff]
        %v778 = vld [vmem:[%s697 + $0xc2] sm:$0xff]
        %v779 = vld [vmem:[%s697 + $0xca] sm:$0xff]
        %v780 = vld [vmem:[%s697 + $0xda] sm:$0xff]
        %v781 = vld [vmem:[%s697 + $0xe2] sm:$0xff]
        %v782 = vld [vmem:[%s697 + $0xf2] sm:$0xff]
        %v783 = vld [vmem:[%s697 + $0xfa] sm:$0xff]
        %v784 = vld [vmem:[%s697 + $0x10a] sm:$0xff]
        %v785 = vld [vmem:[%s697 + $0x112] sm:$0xff]
        %v786 = vld [vmem:[%s697 + $0x122] sm:$0xff]
        %v787 = vld [vmem:[%s697 + $0x12a] sm:$0xff]
        %v788 = vld [vmem:[%s697 + $0x13a] sm:$0xff]
        %v789 = vld [vmem:[%s697 + $0x142] sm:$0xff]
        %v790 = vld [vmem:[%s697 + $0x152] sm:$0xff]
        %v791 = vld [vmem:[%s697 + $0x15a] sm:$0xff]
        %v792 = vld [vmem:[%s697 + $0x16a] sm:$0xff]
        %v793 = vld [vmem:[%s697 + $0x172] sm:$0xff]
        %826 = vrot.lane.b32.xlu0 %v537, 3
        %v827 = vpop.permute.xlu0 %826
        %828 = vrot.lane.b32.xlu0 %v538, 3
        %v829 = vpop.permute.xlu0 %828
        %830 = vrot.lane.b32.xlu0 %v539, 3
        %v831 = vpop.permute.xlu0 %830
        %832 = vrot.lane.b32.xlu0 %v540, 3
        %v833 = vpop.permute.xlu0 %832
        %834 = vrot.lane.b32.xlu0 %v541, 3
        %v835 = vpop.permute.xlu0 %834
        %836 = vrot.lane.b32.xlu0 %v542, 3
        %v837 = vpop.permute.xlu0 %836
        %838 = vrot.lane.b32.xlu0 %v543, 3
        %v839 = vpop.permute.xlu0 %838
        %840 = vrot.lane.b32.xlu0 %v544, 3
        %v841 = vpop.permute.xlu0 %840
        %842 = vrot.lane.b32.xlu0 %v545, 3
        %v843 = vpop.permute.xlu0 %842
        %844 = vrot.lane.b32.xlu0 %v546, 3
        %v845 = vpop.permute.xlu0 %844
        %846 = vrot.lane.b32.xlu0 %v547, 3
        %v847 = vpop.permute.xlu0 %846
        %848 = vrot.lane.b32.xlu0 %v548, 3
        %v849 = vpop.permute.xlu0 %848
        %850 = vrot.lane.b32.xlu0 %v549, 3
        %v851 = vpop.permute.xlu0 %850
        %852 = vrot.lane.b32.xlu0 %v550, 3
        %v853 = vpop.permute.xlu0 %852
        %854 = vrot.lane.b32.xlu0 %v551, 3
        %v855 = vpop.permute.xlu0 %854
        %856 = vrot.lane.b32.xlu0 %v552, 3
        %v857 = vpop.permute.xlu0 %856
        %858 = vrot.lane.b32.xlu0 %v553, 3
        %v859 = vpop.permute.xlu0 %858
        %860 = vrot.lane.b32.xlu0 %v554, 3
        %v861 = vpop.permute.xlu0 %860
        %862 = vrot.lane.b32.xlu0 %v555, 3
        %v863 = vpop.permute.xlu0 %862
        %864 = vrot.lane.b32.xlu0 %v556, 3
        %v865 = vpop.permute.xlu0 %864
        %866 = vrot.lane.b32.xlu0 %v557, 3
        %v867 = vpop.permute.xlu0 %866
        %868 = vrot.lane.b32.xlu0 %v558, 3
        %v869 = vpop.permute.xlu0 %868
        %870 = vrot.lane.b32.xlu0 %v559, 3
        %v871 = vpop.permute.xlu0 %870
        %872 = vrot.lane.b32.xlu0 %v560, 3
        %v873 = vpop.permute.xlu0 %872
        %874 = vrot.lane.b32.xlu0 %v561, 3
        %v875 = vpop.permute.xlu0 %874
        %876 = vrot.lane.b32.xlu0 %v562, 3
        %v877 = vpop.permute.xlu0 %876
        %878 = vrot.lane.b32.xlu0 %v563, 3
        %v879 = vpop.permute.xlu0 %878
        %880 = vrot.lane.b32.xlu0 %v564, 3
        %v881 = vpop.permute.xlu0 %880
        %882 = vrot.lane.b32.xlu0 %v565, 3
        %v883 = vpop.permute.xlu0 %882
        %884 = vrot.lane.b32.xlu0 %v566, 3
        %v885 = vpop.permute.xlu0 %884
        %886 = vrot.lane.b32.xlu0 %v567, 3
        %v887 = vpop.permute.xlu0 %886
        %888 = vrot.lane.b32.xlu0 %v568, 3
        %v889 = vpop.permute.xlu0 %888
        %954 = vrot.lane.b32.xlu0 %v569, 6
        %v955 = vpop.permute.xlu0 %954
        %956 = vrot.lane.b32.xlu0 %v570, 6
        %v957 = vpop.permute.xlu0 %956
        %958 = vrot.lane.b32.xlu0 %v571, 6
        %v959 = vpop.permute.xlu0 %958
        %960 = vrot.lane.b32.xlu0 %v572, 6
        %v961 = vpop.permute.xlu0 %960
        %962 = vrot.lane.b32.xlu0 %v573, 6
        %v963 = vpop.permute.xlu0 %962
        %964 = vrot.lane.b32.xlu0 %v574, 6
        %v965 = vpop.permute.xlu0 %964
        %966 = vrot.lane.b32.xlu0 %v575, 6
        %v967 = vpop.permute.xlu0 %966
        %968 = vrot.lane.b32.xlu0 %v576, 6
        %v969 = vpop.permute.xlu0 %968
        %970 = vrot.lane.b32.xlu0 %v577, 6
        %v971 = vpop.permute.xlu0 %970
        %972 = vrot.lane.b32.xlu0 %v578, 6
        %v973 = vpop.permute.xlu0 %972
        %974 = vrot.lane.b32.xlu0 %v579, 6
        %v975 = vpop.permute.xlu0 %974
        %976 = vrot.lane.b32.xlu0 %v580, 6
        %v977 = vpop.permute.xlu0 %976
        %978 = vrot.lane.b32.xlu0 %v581, 6
        %v979 = vpop.permute.xlu0 %978
        %980 = vrot.lane.b32.xlu0 %v582, 6
        %v981 = vpop.permute.xlu0 %980
        %982 = vrot.lane.b32.xlu0 %v583, 6
        %v983 = vpop.permute.xlu0 %982
        %984 = vrot.lane.b32.xlu0 %v584, 6
        %v985 = vpop.permute.xlu0 %984
        %986 = vrot.lane.b32.xlu0 %v585, 6
        %v987 = vpop.permute.xlu0 %986
        %988 = vrot.lane.b32.xlu0 %v586, 6
        %v989 = vpop.permute.xlu0 %988
        %990 = vrot.lane.b32.xlu0 %v587, 6
        %v991 = vpop.permute.xlu0 %990
        %992 = vrot.lane.b32.xlu0 %v588, 6
        %v993 = vpop.permute.xlu0 %992
        %994 = vrot.lane.b32.xlu0 %v589, 6
        %v995 = vpop.permute.xlu0 %994
        %996 = vrot.lane.b32.xlu0 %v590, 6
        %v997 = vpop.permute.xlu0 %996
        %998 = vrot.lane.b32.xlu0 %v591, 6
        %v999 = vpop.permute.xlu0 %998
        %1000 = vrot.lane.b32.xlu0 %v592, 6
        %v1001 = vpop.permute.xlu0 %1000
        %1002 = vrot.lane.b32.xlu0 %v593, 6
        %v1003 = vpop.permute.xlu0 %1002
        %1004 = vrot.lane.b32.xlu0 %v594, 6
        %v1005 = vpop.permute.xlu0 %1004
        %1006 = vrot.lane.b32.xlu0 %v595, 6
        %v1007 = vpop.permute.xlu0 %1006
        %1008 = vrot.lane.b32.xlu0 %v596, 6
        %v1009 = vpop.permute.xlu0 %1008
        %1010 = vrot.lane.b32.xlu0 %v597, 6
        %v1011 = vpop.permute.xlu0 %1010
        %1012 = vrot.lane.b32.xlu0 %v598, 6
        %v1013 = vpop.permute.xlu0 %1012
        %1014 = vrot.lane.b32.xlu0 %v599, 6
        %v1015 = vpop.permute.xlu0 %1014
        %1016 = vrot.lane.b32.xlu0 %v600, 6
        %v1017 = vpop.permute.xlu0 %1016
        %1082 = vrot.lane.b32.xlu0 %v601, 9
        %v1083 = vpop.permute.xlu0 %1082
        %1084 = vrot.lane.b32.xlu0 %v602, 9
        %v1085 = vpop.permute.xlu0 %1084
        %1086 = vrot.lane.b32.xlu0 %v603, 9
        %v1087 = vpop.permute.xlu0 %1086
        %1088 = vrot.lane.b32.xlu0 %v604, 9
        %v1089 = vpop.permute.xlu0 %1088
        %1090 = vrot.lane.b32.xlu0 %v605, 9
        %v1091 = vpop.permute.xlu0 %1090
        %1092 = vrot.lane.b32.xlu0 %v606, 9
        %v1093 = vpop.permute.xlu0 %1092
        %1094 = vrot.lane.b32.xlu0 %v607, 9
        %v1095 = vpop.permute.xlu0 %1094
        %1096 = vrot.lane.b32.xlu0 %v608, 9
        %v1097 = vpop.permute.xlu0 %1096
        %1098 = vrot.lane.b32.xlu0 %v609, 9
        %v1099 = vpop.permute.xlu0 %1098
        %1100 = vrot.lane.b32.xlu0 %v610, 9
        %v1101 = vpop.permute.xlu0 %1100
        %1102 = vrot.lane.b32.xlu0 %v611, 9
        %v1103 = vpop.permute.xlu0 %1102
        %1104 = vrot.lane.b32.xlu0 %v612, 9
        %v1105 = vpop.permute.xlu0 %1104
        %1106 = vrot.lane.b32.xlu0 %v613, 9
        %v1107 = vpop.permute.xlu0 %1106
        %1108 = vrot.lane.b32.xlu0 %v614, 9
        %v1109 = vpop.permute.xlu0 %1108
        %1110 = vrot.lane.b32.xlu0 %v615, 9
        %v1111 = vpop.permute.xlu0 %1110
        %1112 = vrot.lane.b32.xlu0 %v616, 9
        %v1113 = vpop.permute.xlu0 %1112
        %1114 = vrot.lane.b32.xlu0 %v617, 9
        %v1115 = vpop.permute.xlu0 %1114
        %1116 = vrot.lane.b32.xlu0 %v618, 9
        %v1117 = vpop.permute.xlu0 %1116
        %1118 = vrot.lane.b32.xlu0 %v619, 9
        %v1119 = vpop.permute.xlu0 %1118
        %1120 = vrot.lane.b32.xlu0 %v620, 9
        %v1121 = vpop.permute.xlu0 %1120
        %1122 = vrot.lane.b32.xlu0 %v621, 9
        %v1123 = vpop.permute.xlu0 %1122
        %1124 = vrot.lane.b32.xlu0 %v622, 9
        %v1125 = vpop.permute.xlu0 %1124
        %1126 = vrot.lane.b32.xlu0 %v623, 9
        %v1127 = vpop.permute.xlu0 %1126
        %1128 = vrot.lane.b32.xlu0 %v624, 9
        %v1129 = vpop.permute.xlu0 %1128
        %1130 = vrot.lane.b32.xlu0 %v625, 9
        %v1131 = vpop.permute.xlu0 %1130
        %1132 = vrot.lane.b32.xlu0 %v626, 9
        %v1133 = vpop.permute.xlu0 %1132
        %1134 = vrot.lane.b32.xlu0 %v627, 9
        %v1135 = vpop.permute.xlu0 %1134
        %1136 = vrot.lane.b32.xlu0 %v628, 9
        %v1137 = vpop.permute.xlu0 %1136
        %1138 = vrot.lane.b32.xlu0 %v629, 9
        %v1139 = vpop.permute.xlu0 %1138
        %1140 = vrot.lane.b32.xlu0 %v630, 9
        %v1141 = vpop.permute.xlu0 %1140
        %1142 = vrot.lane.b32.xlu0 %v631, 9
        %v1143 = vpop.permute.xlu0 %1142
        %1144 = vrot.lane.b32.xlu0 %v632, 9
        %v1145 = vpop.permute.xlu0 %1144
        %1210 = vrot.lane.b32.xlu0 %v633, 12
        %v1211 = vpop.permute.xlu0 %1210
        %1212 = vrot.lane.b32.xlu0 %v634, 12
        %v1213 = vpop.permute.xlu0 %1212
        %1214 = vrot.lane.b32.xlu0 %v635, 12
        %v1215 = vpop.permute.xlu0 %1214
        %1216 = vrot.lane.b32.xlu0 %v636, 12
        %v1217 = vpop.permute.xlu0 %1216
        %1218 = vrot.lane.b32.xlu0 %v637, 12
        %v1219 = vpop.permute.xlu0 %1218
        %1220 = vrot.lane.b32.xlu0 %v638, 12
        %v1221 = vpop.permute.xlu0 %1220
        %1222 = vrot.lane.b32.xlu0 %v639, 12
        %v1223 = vpop.permute.xlu0 %1222
        %1224 = vrot.lane.b32.xlu0 %v640, 12
        %v1225 = vpop.permute.xlu0 %1224
        %1226 = vrot.lane.b32.xlu0 %v641, 12
        %v1227 = vpop.permute.xlu0 %1226
        %1228 = vrot.lane.b32.xlu0 %v642, 12
        %v1229 = vpop.permute.xlu0 %1228
        %1230 = vrot.lane.b32.xlu0 %v643, 12
        %v1231 = vpop.permute.xlu0 %1230
        %1232 = vrot.lane.b32.xlu0 %v644, 12
        %v1233 = vpop.permute.xlu0 %1232
        %1234 = vrot.lane.b32.xlu0 %v645, 12
        %v1235 = vpop.permute.xlu0 %1234
        %1236 = vrot.lane.b32.xlu0 %v646, 12
        %v1237 = vpop.permute.xlu0 %1236
        %1238 = vrot.lane.b32.xlu0 %v647, 12
        %v1239 = vpop.permute.xlu0 %1238
        %1240 = vrot.lane.b32.xlu0 %v648, 12
        %v1241 = vpop.permute.xlu0 %1240
        %1242 = vrot.lane.b32.xlu0 %v649, 12
        %v1243 = vpop.permute.xlu0 %1242
        %1244 = vrot.lane.b32.xlu0 %v650, 12
        %v1245 = vpop.permute.xlu0 %1244
        %1246 = vrot.lane.b32.xlu0 %v651, 12
        %v1247 = vpop.permute.xlu0 %1246
        %1248 = vrot.lane.b32.xlu0 %v652, 12
        %v1249 = vpop.permute.xlu0 %1248
        %1250 = vrot.lane.b32.xlu0 %v653, 12
        %v1251 = vpop.permute.xlu0 %1250
        %1252 = vrot.lane.b32.xlu0 %v654, 12
        %v1253 = vpop.permute.xlu0 %1252
        %1254 = vrot.lane.b32.xlu0 %v655, 12
        %v1255 = vpop.permute.xlu0 %1254
        %1256 = vrot.lane.b32.xlu0 %v656, 12
        %v1257 = vpop.permute.xlu0 %1256
        %1258 = vrot.lane.b32.xlu0 %v657, 12
        %v1259 = vpop.permute.xlu0 %1258
        %1260 = vrot.lane.b32.xlu0 %v658, 12
        %v1261 = vpop.permute.xlu0 %1260
        %1262 = vrot.lane.b32.xlu0 %v659, 12
        %v1263 = vpop.permute.xlu0 %1262
        %1264 = vrot.lane.b32.xlu0 %v660, 12
        %v1265 = vpop.permute.xlu0 %1264
        %1266 = vrot.lane.b32.xlu0 %v661, 12
        %v1267 = vpop.permute.xlu0 %1266
        %1268 = vrot.lane.b32.xlu0 %v662, 12
        %v1269 = vpop.permute.xlu0 %1268
        %1270 = vrot.lane.b32.xlu0 %v663, 12
        %v1271 = vpop.permute.xlu0 %1270
        %1272 = vrot.lane.b32.xlu0 %v664, 12
        %v1273 = vpop.permute.xlu0 %1272
        %1338 = vrot.lane.b32.xlu0 %v665, 15
        %v1339 = vpop.permute.xlu0 %1338
        %1340 = vrot.lane.b32.xlu0 %v666, 15
        %v1341 = vpop.permute.xlu0 %1340
        %1342 = vrot.lane.b32.xlu0 %v667, 15
        %v1343 = vpop.permute.xlu0 %1342
        %1344 = vrot.lane.b32.xlu0 %v668, 15
        %v1345 = vpop.permute.xlu0 %1344
        %1346 = vrot.lane.b32.xlu0 %v669, 15
        %v1347 = vpop.permute.xlu0 %1346
        %1348 = vrot.lane.b32.xlu0 %v670, 15
        %v1349 = vpop.permute.xlu0 %1348
        %1350 = vrot.lane.b32.xlu0 %v671, 15
        %v1351 = vpop.permute.xlu0 %1350
        %1352 = vrot.lane.b32.xlu0 %v672, 15
        %v1353 = vpop.permute.xlu0 %1352
        %1354 = vrot.lane.b32.xlu0 %v673, 15
        %v1355 = vpop.permute.xlu0 %1354
        %1356 = vrot.lane.b32.xlu0 %v674, 15
        %v1357 = vpop.permute.xlu0 %1356
        %1358 = vrot.lane.b32.xlu0 %v675, 15
        %v1359 = vpop.permute.xlu0 %1358
        %1360 = vrot.lane.b32.xlu0 %v676, 15
        %v1361 = vpop.permute.xlu0 %1360
        %1362 = vrot.lane.b32.xlu0 %v677, 15
        %v1363 = vpop.permute.xlu0 %1362
        %1364 = vrot.lane.b32.xlu0 %v678, 15
        %v1365 = vpop.permute.xlu0 %1364
        %1366 = vrot.lane.b32.xlu0 %v679, 15
        %v1367 = vpop.permute.xlu0 %1366
        %1368 = vrot.lane.b32.xlu0 %v680, 15
        %v1369 = vpop.permute.xlu0 %1368
        %1370 = vrot.lane.b32.xlu0 %v681, 15
        %v1371 = vpop.permute.xlu0 %1370
        %1372 = vrot.lane.b32.xlu0 %v682, 15
        %v1373 = vpop.permute.xlu0 %1372
        %1374 = vrot.lane.b32.xlu0 %v683, 15
        %v1375 = vpop.permute.xlu0 %1374
        %1376 = vrot.lane.b32.xlu0 %v684, 15
        %v1377 = vpop.permute.xlu0 %1376
        %1378 = vrot.lane.b32.xlu0 %v685, 15
        %v1379 = vpop.permute.xlu0 %1378
        %1380 = vrot.lane.b32.xlu0 %v686, 15
        %v1381 = vpop.permute.xlu0 %1380
        %1382 = vrot.lane.b32.xlu0 %v687, 15
        %v1383 = vpop.permute.xlu0 %1382
        %1384 = vrot.lane.b32.xlu0 %v688, 15
        %v1385 = vpop.permute.xlu0 %1384
        %1386 = vrot.lane.b32.xlu0 %v689, 15
        %v1387 = vpop.permute.xlu0 %1386
        %1388 = vrot.lane.b32.xlu0 %v690, 15
        %v1389 = vpop.permute.xlu0 %1388
        %1390 = vrot.lane.b32.xlu0 %v691, 15
        %v1391 = vpop.permute.xlu0 %1390
        %1392 = vrot.lane.b32.xlu0 %v692, 15
        %v1393 = vpop.permute.xlu0 %1392
        %1394 = vrot.lane.b32.xlu0 %v693, 15
        %v1395 = vpop.permute.xlu0 %1394
        %1396 = vrot.lane.b32.xlu0 %v694, 15
        %v1397 = vpop.permute.xlu0 %1396
        %1398 = vrot.lane.b32.xlu0 %v695, 15
        %v1399 = vpop.permute.xlu0 %1398
        %1400 = vrot.lane.b32.xlu0 %v696, 15
        %v1401 = vpop.permute.xlu0 %1400
        %1466 = vrot.lane.b32.xlu0 %v698, 18
        %v1467 = vpop.permute.xlu0 %1466
        %1468 = vrot.lane.b32.xlu0 %v699, 18
        %v1469 = vpop.permute.xlu0 %1468
        %1470 = vrot.lane.b32.xlu0 %v700, 18
        %v1471 = vpop.permute.xlu0 %1470
        %1472 = vrot.lane.b32.xlu0 %v701, 18
        %v1473 = vpop.permute.xlu0 %1472
        %1474 = vrot.lane.b32.xlu0 %v702, 18
        %v1475 = vpop.permute.xlu0 %1474
        %1476 = vrot.lane.b32.xlu0 %v703, 18
        %v1477 = vpop.permute.xlu0 %1476
        %1478 = vrot.lane.b32.xlu0 %v704, 18
        %v1479 = vpop.permute.xlu0 %1478
        %1480 = vrot.lane.b32.xlu0 %v705, 18
        %v1481 = vpop.permute.xlu0 %1480
        %1482 = vrot.lane.b32.xlu0 %v706, 18
        %v1483 = vpop.permute.xlu0 %1482
        %1484 = vrot.lane.b32.xlu0 %v707, 18
        %v1485 = vpop.permute.xlu0 %1484
        %1486 = vrot.lane.b32.xlu0 %v708, 18
        %v1487 = vpop.permute.xlu0 %1486
        %1488 = vrot.lane.b32.xlu0 %v709, 18
        %v1489 = vpop.permute.xlu0 %1488
        %1490 = vrot.lane.b32.xlu0 %v710, 18
        %v1491 = vpop.permute.xlu0 %1490
        %1492 = vrot.lane.b32.xlu0 %v711, 18
        %v1493 = vpop.permute.xlu0 %1492
        %1494 = vrot.lane.b32.xlu0 %v712, 18
        %v1495 = vpop.permute.xlu0 %1494
        %1496 = vrot.lane.b32.xlu0 %v713, 18
        %v1497 = vpop.permute.xlu0 %1496
        %1498 = vrot.lane.b32.xlu0 %v714, 18
        %v1499 = vpop.permute.xlu0 %1498
        %1500 = vrot.lane.b32.xlu0 %v715, 18
        %v1501 = vpop.permute.xlu0 %1500
        %1502 = vrot.lane.b32.xlu0 %v716, 18
        %v1503 = vpop.permute.xlu0 %1502
        %1504 = vrot.lane.b32.xlu0 %v717, 18
        %v1505 = vpop.permute.xlu0 %1504
        %1506 = vrot.lane.b32.xlu0 %v718, 18
        %v1507 = vpop.permute.xlu0 %1506
        %1508 = vrot.lane.b32.xlu0 %v719, 18
        %v1509 = vpop.permute.xlu0 %1508
        %1510 = vrot.lane.b32.xlu0 %v720, 18
        %v1511 = vpop.permute.xlu0 %1510
        %1512 = vrot.lane.b32.xlu0 %v721, 18
        %v1513 = vpop.permute.xlu0 %1512
        %1514 = vrot.lane.b32.xlu0 %v722, 18
        %v1515 = vpop.permute.xlu0 %1514
        %1516 = vrot.lane.b32.xlu0 %v723, 18
        %v1517 = vpop.permute.xlu0 %1516
        %1518 = vrot.lane.b32.xlu0 %v724, 18
        %v1519 = vpop.permute.xlu0 %1518
        %1520 = vrot.lane.b32.xlu0 %v725, 18
        %v1521 = vpop.permute.xlu0 %1520
        %1522 = vrot.lane.b32.xlu0 %v726, 18
        %v1523 = vpop.permute.xlu0 %1522
        %1524 = vrot.lane.b32.xlu0 %v727, 18
        %v1525 = vpop.permute.xlu0 %1524
        %1526 = vrot.lane.b32.xlu0 %v728, 18
        %v1527 = vpop.permute.xlu0 %1526
        %1528 = vrot.lane.b32.xlu0 %v729, 18
        %v1529 = vpop.permute.xlu0 %1528
        %1594 = vrot.lane.b32.xlu0 %v730, 21
        %v1595 = vpop.permute.xlu0 %1594
        %1596 = vrot.lane.b32.xlu0 %v731, 21
        %v1597 = vpop.permute.xlu0 %1596
        %1598 = vrot.lane.b32.xlu0 %v732, 21
        %v1599 = vpop.permute.xlu0 %1598
        %1600 = vrot.lane.b32.xlu0 %v733, 21
        %v1601 = vpop.permute.xlu0 %1600
        %1602 = vrot.lane.b32.xlu0 %v734, 21
        %v1603 = vpop.permute.xlu0 %1602
        %1604 = vrot.lane.b32.xlu0 %v735, 21
        %v1605 = vpop.permute.xlu0 %1604
        %1606 = vrot.lane.b32.xlu0 %v736, 21
        %v1607 = vpop.permute.xlu0 %1606
        %1608 = vrot.lane.b32.xlu0 %v737, 21
        %v1609 = vpop.permute.xlu0 %1608
        %1610 = vrot.lane.b32.xlu0 %v738, 21
        %v1611 = vpop.permute.xlu0 %1610
        %1612 = vrot.lane.b32.xlu0 %v739, 21
        %v1613 = vpop.permute.xlu0 %1612
        %1614 = vrot.lane.b32.xlu0 %v740, 21
        %v1615 = vpop.permute.xlu0 %1614
        %1616 = vrot.lane.b32.xlu0 %v741, 21
        %v1617 = vpop.permute.xlu0 %1616
        %1618 = vrot.lane.b32.xlu0 %v742, 21
        %v1619 = vpop.permute.xlu0 %1618
        %1620 = vrot.lane.b32.xlu0 %v743, 21
        %v1621 = vpop.permute.xlu0 %1620
        %1622 = vrot.lane.b32.xlu0 %v744, 21
        %v1623 = vpop.permute.xlu0 %1622
        %1624 = vrot.lane.b32.xlu0 %v745, 21
        %v1625 = vpop.permute.xlu0 %1624
        %1626 = vrot.lane.b32.xlu0 %v746, 21
        %v1627 = vpop.permute.xlu0 %1626
        %1628 = vrot.lane.b32.xlu0 %v747, 21
        %v1629 = vpop.permute.xlu0 %1628
        %1630 = vrot.lane.b32.xlu0 %v748, 21
        %v1631 = vpop.permute.xlu0 %1630
        %1632 = vrot.lane.b32.xlu0 %v749, 21
        %v1633 = vpop.permute.xlu0 %1632
        %1634 = vrot.lane.b32.xlu0 %v750, 21
        %v1635 = vpop.permute.xlu0 %1634
        %1636 = vrot.lane.b32.xlu0 %v751, 21
        %v1637 = vpop.permute.xlu0 %1636
        %1638 = vrot.lane.b32.xlu0 %v752, 21
        %v1639 = vpop.permute.xlu0 %1638
        %1640 = vrot.lane.b32.xlu0 %v753, 21
        %v1641 = vpop.permute.xlu0 %1640
        %1642 = vrot.lane.b32.xlu0 %v754, 21
        %v1643 = vpop.permute.xlu0 %1642
        %1644 = vrot.lane.b32.xlu0 %v755, 21
        %v1645 = vpop.permute.xlu0 %1644
        %1646 = vrot.lane.b32.xlu0 %v756, 21
        %v1647 = vpop.permute.xlu0 %1646
        %1648 = vrot.lane.b32.xlu0 %v757, 21
        %v1649 = vpop.permute.xlu0 %1648
        %1650 = vrot.lane.b32.xlu0 %v758, 21
        %v1651 = vpop.permute.xlu0 %1650
        %1652 = vrot.lane.b32.xlu0 %v759, 21
        %v1653 = vpop.permute.xlu0 %1652
        %1654 = vrot.lane.b32.xlu0 %v760, 21
        %v1655 = vpop.permute.xlu0 %1654
        %1656 = vrot.lane.b32.xlu0 %v761, 21
        %v1657 = vpop.permute.xlu0 %1656
        %1722 = vrot.lane.b32.xlu0 %v762, 24
        %v1723 = vpop.permute.xlu0 %1722
        %1724 = vrot.lane.b32.xlu0 %v763, 24
        %v1725 = vpop.permute.xlu0 %1724
        %1726 = vrot.lane.b32.xlu0 %v764, 24
        %v1727 = vpop.permute.xlu0 %1726
        %1728 = vrot.lane.b32.xlu0 %v765, 24
        %v1729 = vpop.permute.xlu0 %1728
        %1730 = vrot.lane.b32.xlu0 %v766, 24
        %v1731 = vpop.permute.xlu0 %1730
        %1732 = vrot.lane.b32.xlu0 %v767, 24
        %v1733 = vpop.permute.xlu0 %1732
        %1734 = vrot.lane.b32.xlu0 %v768, 24
        %v1735 = vpop.permute.xlu0 %1734
        %1736 = vrot.lane.b32.xlu0 %v769, 24
        %v1737 = vpop.permute.xlu0 %1736
        %1738 = vrot.lane.b32.xlu0 %v770, 24
        %v1739 = vpop.permute.xlu0 %1738
        %1740 = vrot.lane.b32.xlu0 %v771, 24
        %v1741 = vpop.permute.xlu0 %1740
        %1742 = vrot.lane.b32.xlu0 %v772, 24
        %v1743 = vpop.permute.xlu0 %1742
        %1744 = vrot.lane.b32.xlu0 %v773, 24
        %v1745 = vpop.permute.xlu0 %1744
        %1746 = vrot.lane.b32.xlu0 %v774, 24
        %v1747 = vpop.permute.xlu0 %1746
        %1748 = vrot.lane.b32.xlu0 %v775, 24
        %v1749 = vpop.permute.xlu0 %1748
        %1750 = vrot.lane.b32.xlu0 %v776, 24
        %v1751 = vpop.permute.xlu0 %1750
        %1752 = vrot.lane.b32.xlu0 %v777, 24
        %v1753 = vpop.permute.xlu0 %1752
        %1754 = vrot.lane.b32.xlu0 %v778, 24
        %v1755 = vpop.permute.xlu0 %1754
        %1756 = vrot.lane.b32.xlu0 %v779, 24
        %v1757 = vpop.permute.xlu0 %1756
        %1758 = vrot.lane.b32.xlu0 %v780, 24
        %v1759 = vpop.permute.xlu0 %1758
        %1760 = vrot.lane.b32.xlu0 %v781, 24
        %v1761 = vpop.permute.xlu0 %1760
        %1762 = vrot.lane.b32.xlu0 %v782, 24
        %v1763 = vpop.permute.xlu0 %1762
        %1764 = vrot.lane.b32.xlu0 %v783, 24
        %v1765 = vpop.permute.xlu0 %1764
        %1766 = vrot.lane.b32.xlu0 %v784, 24
        %v1767 = vpop.permute.xlu0 %1766
        %1768 = vrot.lane.b32.xlu0 %v785, 24
        %v1769 = vpop.permute.xlu0 %1768
        %1770 = vrot.lane.b32.xlu0 %v786, 24
        %v1771 = vpop.permute.xlu0 %1770
        %1772 = vrot.lane.b32.xlu0 %v787, 24
        %v1773 = vpop.permute.xlu0 %1772
        %1774 = vrot.lane.b32.xlu0 %v788, 24
        %v1775 = vpop.permute.xlu0 %1774
        %1776 = vrot.lane.b32.xlu0 %v789, 24
        %v1777 = vpop.permute.xlu0 %1776
        %1778 = vrot.lane.b32.xlu0 %v790, 24
        %v1779 = vpop.permute.xlu0 %1778
        %1780 = vrot.lane.b32.xlu0 %v791, 24
        %v1781 = vpop.permute.xlu0 %1780
        %1782 = vrot.lane.b32.xlu0 %v792, 24
        %v1783 = vpop.permute.xlu0 %1782
        %1784 = vrot.lane.b32.xlu0 %v793, 24
        %v1785 = vpop.permute.xlu0 %1784
        %v1818 = vsel %vm451, %v505, %v827
        %v1819 = vsel %vm451, %v506, %v829
        %v1820 = vsel %vm451, %v507, %v831
        %v1821 = vsel %vm451, %v508, %v833
        %v1822 = vsel %vm451, %v509, %v835
        %v1823 = vsel %vm451, %v510, %v837
        %v1824 = vsel %vm451, %v511, %v839
        %v1825 = vsel %vm451, %v512, %v841
        %v1826 = vsel %vm451, %v513, %v843
        %v1827 = vsel %vm451, %v514, %v845
        %v1828 = vsel %vm451, %v515, %v847
        %v1829 = vsel %vm451, %v516, %v849
        %v1830 = vsel %vm451, %v517, %v851
        %v1831 = vsel %vm451, %v518, %v853
        %v1832 = vsel %vm451, %v519, %v855
        %v1833 = vsel %vm451, %v520, %v857
        %v1834 = vsel %vm451, %v521, %v859
        %v1835 = vsel %vm451, %v522, %v861
        %v1836 = vsel %vm451, %v523, %v863
        %v1837 = vsel %vm451, %v524, %v865
        %v1838 = vsel %vm451, %v525, %v867
        %v1839 = vsel %vm451, %v526, %v869
        %v1840 = vsel %vm451, %v527, %v871
        %v1841 = vsel %vm451, %v528, %v873
        %v1842 = vsel %vm451, %v529, %v875
        %v1843 = vsel %vm451, %v530, %v877
        %v1844 = vsel %vm451, %v531, %v879
        %v1845 = vsel %vm451, %v532, %v881
        %v1846 = vsel %vm451, %v533, %v883
        %v1847 = vsel %vm451, %v534, %v885
        %v1848 = vsel %vm451, %v535, %v887
        %v1849 = vsel %vm451, %v536, %v889
        %vm1850 = vcmask 48128
        %v1851 = vsel %vm1850, %v1818, %v955
        %v1852 = vsel %vm1850, %v1819, %v957
        %v1853 = vsel %vm1850, %v1820, %v959
        %v1854 = vsel %vm1850, %v1821, %v961
        %v1855 = vsel %vm1850, %v1822, %v963
        %v1856 = vsel %vm1850, %v1823, %v965
        %v1857 = vsel %vm1850, %v1824, %v967
        %v1858 = vsel %vm1850, %v1825, %v969
        %v1859 = vsel %vm1850, %v1826, %v971
        %v1860 = vsel %vm1850, %v1827, %v973
        %v1861 = vsel %vm1850, %v1828, %v975
        %v1862 = vsel %vm1850, %v1829, %v977
        %v1863 = vsel %vm1850, %v1830, %v979
        %v1864 = vsel %vm1850, %v1831, %v981
        %v1865 = vsel %vm1850, %v1832, %v983
        %v1866 = vsel %vm1850, %v1833, %v985
        %v1867 = vsel %vm1850, %v1834, %v987
        %v1868 = vsel %vm1850, %v1835, %v989
        %v1869 = vsel %vm1850, %v1836, %v991
        %v1870 = vsel %vm1850, %v1837, %v993
        %v1871 = vsel %vm1850, %v1838, %v995
        %v1872 = vsel %vm1850, %v1839, %v997
        %v1873 = vsel %vm1850, %v1840, %v999
        %v1874 = vsel %vm1850, %v1841, %v1001
        %v1875 = vsel %vm1850, %v1842, %v1003
        %v1876 = vsel %vm1850, %v1843, %v1005
        %v1877 = vsel %vm1850, %v1844, %v1007
        %v1878 = vsel %vm1850, %v1845, %v1009
        %v1879 = vsel %vm1850, %v1846, %v1011
        %v1880 = vsel %vm1850, %v1847, %v1013
        %v1881 = vsel %vm1850, %v1848, %v1015
        %v1882 = vsel %vm1850, %v1849, %v1017
        %vm1883 = vcmask 72704
        %v1884 = vsel %vm1883, %v1851, %v1083
        %v1885 = vsel %vm1883, %v1852, %v1085
        %v1886 = vsel %vm1883, %v1853, %v1087
        %v1887 = vsel %vm1883, %v1854, %v1089
        %v1888 = vsel %vm1883, %v1855, %v1091
        %v1889 = vsel %vm1883, %v1856, %v1093
        %v1890 = vsel %vm1883, %v1857, %v1095
        %v1891 = vsel %vm1883, %v1858, %v1097
        %v1892 = vsel %vm1883, %v1859, %v1099
        %v1893 = vsel %vm1883, %v1860, %v1101
        %v1894 = vsel %vm1883, %v1861, %v1103
        %v1895 = vsel %vm1883, %v1862, %v1105
        %v1896 = vsel %vm1883, %v1863, %v1107
        %v1897 = vsel %vm1883, %v1864, %v1109
        %v1898 = vsel %vm1883, %v1865, %v1111
        %v1899 = vsel %vm1883, %v1866, %v1113
        %v1900 = vsel %vm1883, %v1867, %v1115
        %v1901 = vsel %vm1883, %v1868, %v1117
        %v1902 = vsel %vm1883, %v1869, %v1119
        %v1903 = vsel %vm1883, %v1870, %v1121
        %v1904 = vsel %vm1883, %v1871, %v1123
        %v1905 = vsel %vm1883, %v1872, %v1125
        %v1906 = vsel %vm1883, %v1873, %v1127
        %v1907 = vsel %vm1883, %v1874, %v1129
        %v1908 = vsel %vm1883, %v1875, %v1131
        %v1909 = vsel %vm1883, %v1876, %v1133
        %v1910 = vsel %vm1883, %v1877, %v1135
        %v1911 = vsel %vm1883, %v1878, %v1137
        %v1912 = vsel %vm1883, %v1879, %v1139
        %v1913 = vsel %vm1883, %v1880, %v1141
        %v1914 = vsel %vm1883, %v1881, %v1143
        %v1915 = vsel %vm1883, %v1882, %v1145
        %vm1916 = vcmask 97280
        %v1917 = vsel %vm1916, %v1884, %v1211
        %v1918 = vsel %vm1916, %v1885, %v1213
        %v1919 = vsel %vm1916, %v1886, %v1215
        %v1920 = vsel %vm1916, %v1887, %v1217
        %v1921 = vsel %vm1916, %v1888, %v1219
        %v1922 = vsel %vm1916, %v1889, %v1221
        %v1923 = vsel %vm1916, %v1890, %v1223
        %v1924 = vsel %vm1916, %v1891, %v1225
        %v1925 = vsel %vm1916, %v1892, %v1227
        %v1926 = vsel %vm1916, %v1893, %v1229
        %v1927 = vsel %vm1916, %v1894, %v1231
        %v1928 = vsel %vm1916, %v1895, %v1233
        %v1929 = vsel %vm1916, %v1896, %v1235
        %v1930 = vsel %vm1916, %v1897, %v1237
        %v1931 = vsel %vm1916, %v1898, %v1239
        %v1932 = vsel %vm1916, %v1899, %v1241
        %v1933 = vsel %vm1916, %v1900, %v1243
        %v1934 = vsel %vm1916, %v1901, %v1245
        %v1935 = vsel %vm1916, %v1902, %v1247
        %v1936 = vsel %vm1916, %v1903, %v1249
        %v1937 = vsel %vm1916, %v1904, %v1251
        %v1938 = vsel %vm1916, %v1905, %v1253
        %v1939 = vsel %vm1916, %v1906, %v1255
        %v1940 = vsel %vm1916, %v1907, %v1257
        %v1941 = vsel %vm1916, %v1908, %v1259
        %v1942 = vsel %vm1916, %v1909, %v1261
        %v1943 = vsel %vm1916, %v1910, %v1263
        %v1944 = vsel %vm1916, %v1911, %v1265
        %v1945 = vsel %vm1916, %v1912, %v1267
        %v1946 = vsel %vm1916, %v1913, %v1269
        %v1947 = vsel %vm1916, %v1914, %v1271
        %v1948 = vsel %vm1916, %v1915, %v1273
        %vm1949 = vcmask 121856
        %v1950 = vsel %vm1949, %v1917, %v1339
        %v1951 = vsel %vm1949, %v1918, %v1341
        %v1952 = vsel %vm1949, %v1919, %v1343
        %v1953 = vsel %vm1949, %v1920, %v1345
        %v1954 = vsel %vm1949, %v1921, %v1347
        %v1955 = vsel %vm1949, %v1922, %v1349
        %v1956 = vsel %vm1949, %v1923, %v1351
        %v1957 = vsel %vm1949, %v1924, %v1353
        %v1958 = vsel %vm1949, %v1925, %v1355
        %v1959 = vsel %vm1949, %v1926, %v1357
        %v1960 = vsel %vm1949, %v1927, %v1359
        %v1961 = vsel %vm1949, %v1928, %v1361
        %v1962 = vsel %vm1949, %v1929, %v1363
        %v1963 = vsel %vm1949, %v1930, %v1365
        %v1964 = vsel %vm1949, %v1931, %v1367
        %v1965 = vsel %vm1949, %v1932, %v1369
        %v1966 = vsel %vm1949, %v1933, %v1371
        %v1967 = vsel %vm1949, %v1934, %v1373
        %v1968 = vsel %vm1949, %v1935, %v1375
        %v1969 = vsel %vm1949, %v1936, %v1377
        %v1970 = vsel %vm1949, %v1937, %v1379
        %v1971 = vsel %vm1949, %v1938, %v1381
        %v1972 = vsel %vm1949, %v1939, %v1383
        %v1973 = vsel %vm1949, %v1940, %v1385
        %v1974 = vsel %vm1949, %v1941, %v1387
        %v1975 = vsel %vm1949, %v1942, %v1389
        %v1976 = vsel %vm1949, %v1943, %v1391
        %v1977 = vsel %vm1949, %v1944, %v1393
        %v1978 = vsel %vm1949, %v1945, %v1395
        %v1979 = vsel %vm1949, %v1946, %v1397
        %v1980 = vsel %vm1949, %v1947, %v1399
        %v1981 = vsel %vm1949, %v1948, %v1401
        %vm1982 = vcmask 146432
        %v1983 = vsel %vm1982, %v1950, %v1467
        %v1984 = vsel %vm1982, %v1951, %v1469
        %v1985 = vsel %vm1982, %v1952, %v1471
        %v1986 = vsel %vm1982, %v1953, %v1473
        %v1987 = vsel %vm1982, %v1954, %v1475
        %v1988 = vsel %vm1982, %v1955, %v1477
        %v1989 = vsel %vm1982, %v1956, %v1479
        %v1990 = vsel %vm1982, %v1957, %v1481
        %v1991 = vsel %vm1982, %v1958, %v1483
        %v1992 = vsel %vm1982, %v1959, %v1485
        %v1993 = vsel %vm1982, %v1960, %v1487
        %v1994 = vsel %vm1982, %v1961, %v1489
        %v1995 = vsel %vm1982, %v1962, %v1491
        %v1996 = vsel %vm1982, %v1963, %v1493
        %v1997 = vsel %vm1982, %v1964, %v1495
        %v1998 = vsel %vm1982, %v1965, %v1497
        %v1999 = vsel %vm1982, %v1966, %v1499
        %v2000 = vsel %vm1982, %v1967, %v1501
        %v2001 = vsel %vm1982, %v1968, %v1503
        %v2002 = vsel %vm1982, %v1969, %v1505
        %v2003 = vsel %vm1982, %v1970, %v1507
        %v2004 = vsel %vm1982, %v1971, %v1509
        %v2005 = vsel %vm1982, %v1972, %v1511
        %v2006 = vsel %vm1982, %v1973, %v1513
        %v2007 = vsel %vm1982, %v1974, %v1515
        %v2008 = vsel %vm1982, %v1975, %v1517
        %v2009 = vsel %vm1982, %v1976, %v1519
        %v2010 = vsel %vm1982, %v1977, %v1521
        %v2011 = vsel %vm1982, %v1978, %v1523
        %v2012 = vsel %vm1982, %v1979, %v1525
        %v2013 = vsel %vm1982, %v1980, %v1527
        %v2014 = vsel %vm1982, %v1981, %v1529
        %vm2015 = vcmask 171008
        %v2016 = vsel %vm2015, %v1983, %v1595
        %v2017 = vsel %vm2015, %v1984, %v1597
        %v2018 = vsel %vm2015, %v1985, %v1599
        %v2019 = vsel %vm2015, %v1986, %v1601
        %v2020 = vsel %vm2015, %v1987, %v1603
        %v2021 = vsel %vm2015, %v1988, %v1605
        %v2022 = vsel %vm2015, %v1989, %v1607
        %v2023 = vsel %vm2015, %v1990, %v1609
        %v2024 = vsel %vm2015, %v1991, %v1611
        %v2025 = vsel %vm2015, %v1992, %v1613
        %v2026 = vsel %vm2015, %v1993, %v1615
        %v2027 = vsel %vm2015, %v1994, %v1617
        %v2028 = vsel %vm2015, %v1995, %v1619
        %v2029 = vsel %vm2015, %v1996, %v1621
        %v2030 = vsel %vm2015, %v1997, %v1623
        %v2031 = vsel %vm2015, %v1998, %v1625
        %v2032 = vsel %vm2015, %v1999, %v1627
        %v2033 = vsel %vm2015, %v2000, %v1629
        %v2034 = vsel %vm2015, %v2001, %v1631
        %v2035 = vsel %vm2015, %v2002, %v1633
        %v2036 = vsel %vm2015, %v2003, %v1635
        %v2037 = vsel %vm2015, %v2004, %v1637
        %v2038 = vsel %vm2015, %v2005, %v1639
        %v2039 = vsel %vm2015, %v2006, %v1641
        %v2040 = vsel %vm2015, %v2007, %v1643
        %v2041 = vsel %vm2015, %v2008, %v1645
        %v2042 = vsel %vm2015, %v2009, %v1647
        %v2043 = vsel %vm2015, %v2010, %v1649
        %v2044 = vsel %vm2015, %v2011, %v1651
        %v2045 = vsel %vm2015, %v2012, %v1653
        %v2046 = vsel %vm2015, %v2013, %v1655
        %v2047 = vsel %vm2015, %v2014, %v1657
        %vm2048 = vcmask 195584
        %v2049 = vsel %vm2048, %v2016, %v1723
        %v2050 = vsel %vm2048, %v2017, %v1725
        %v2051 = vsel %vm2048, %v2018, %v1727
        %v2052 = vsel %vm2048, %v2019, %v1729
        %v2053 = vsel %vm2048, %v2020, %v1731
        %v2054 = vsel %vm2048, %v2021, %v1733
        %v2055 = vsel %vm2048, %v2022, %v1735
        %v2056 = vsel %vm2048, %v2023, %v1737
        %v2057 = vsel %vm2048, %v2024, %v1739
        %v2058 = vsel %vm2048, %v2025, %v1741
        %v2059 = vsel %vm2048, %v2026, %v1743
        %v2060 = vsel %vm2048, %v2027, %v1745
        %v2061 = vsel %vm2048, %v2028, %v1747
        %v2062 = vsel %vm2048, %v2029, %v1749
        %v2063 = vsel %vm2048, %v2030, %v1751
        %v2064 = vsel %vm2048, %v2031, %v1753
        %v2065 = vsel %vm2048, %v2032, %v1755
        %v2066 = vsel %vm2048, %v2033, %v1757
        %v2067 = vsel %vm2048, %v2034, %v1759
        %v2068 = vsel %vm2048, %v2035, %v1761
        %v2069 = vsel %vm2048, %v2036, %v1763
        %v2070 = vsel %vm2048, %v2037, %v1765
        %v2071 = vsel %vm2048, %v2038, %v1767
        %v2072 = vsel %vm2048, %v2039, %v1769
        %v2073 = vsel %vm2048, %v2040, %v1771
        %v2074 = vsel %vm2048, %v2041, %v1773
        %v2075 = vsel %vm2048, %v2042, %v1775
        %v2076 = vsel %vm2048, %v2043, %v1777
        %v2077 = vsel %vm2048, %v2044, %v1779
        %v2078 = vsel %vm2048, %v2045, %v1781
        %v2079 = vsel %vm2048, %v2046, %v1783
        %v2080 = vsel %vm2048, %v2047, %v1785
        %v2081 = vld [vmem:[%s3] sm:$0xff]
        %v2082 = vld [vmem:[%s3 + $0x8] sm:$0xff]
        %v2083 = vld [vmem:[%s3 + $0x10] sm:$0xff]
        %v2084 = vld [vmem:[%s3 + $0x18] sm:$0x7]
        %v2085 = vld [vmem:[%s4] sm:$0x1]
        %v2087 = vperm.slane %v2085, 0
        %vm2089 = vcmask 220160
        %v2091 = vsel %vm2089, %v2049, 0
        %v2094 = vsel %vm2089, %v2050, 0
        %v2097 = vsel %vm2089, %v2051, 0
        %v2100 = vsel %vm2089, %v2052, 0
        %v2103 = vsel %vm2089, %v2053, 0
        %v2106 = vsel %vm2089, %v2054, 0
        %v2109 = vsel %vm2089, %v2055, 0
        %v2112 = vsel %vm2089, %v2056, 0
        %v2115 = vsel %vm2089, %v2057, 0
        %v2118 = vsel %vm2089, %v2058, 0
        %v2121 = vsel %vm2089, %v2059, 0
        %v2124 = vsel %vm2089, %v2060, 0
        %v2127 = vsel %vm2089, %v2061, 0
        %v2130 = vsel %vm2089, %v2062, 0
        %v2133 = vsel %vm2089, %v2063, 0
        %v2136 = vsel %vm2089, %v2064, 0
        %v2139 = vsel %vm2089, %v2065, 0
        %v2142 = vsel %vm2089, %v2066, 0
        %v2145 = vsel %vm2089, %v2067, 0
        %v2148 = vsel %vm2089, %v2068, 0
        %v2151 = vsel %vm2089, %v2069, 0
        %v2154 = vsel %vm2089, %v2070, 0
        %v2157 = vsel %vm2089, %v2071, 0
        %v2160 = vsel %vm2089, %v2072, 0
        %v2163 = vsel %vm2089, %v2073, 0
        %v2166 = vsel %vm2089, %v2074, 0
        %v2169 = vsel %vm2089, %v2075, 0
        %v2172 = vsel %vm2089, %v2076, 0
        %v2175 = vsel %vm2089, %v2077, 0
        %v2178 = vsel %vm2089, %v2078, 0
        %v2181 = vsel %vm2089, %v2079, 0
        %v2184 = vsel %vm2089, %v2080, 0
        %vm2186 = vcmask 1042432
        %v2188 = vsel %vm2186, %v2084, 0
        %2190 = vmatpush.msra.mxu0 0.0
        %2191 = vmatpush.msra.mxu0 0.0
        %2192 = vmatpush.msra.mxu0 0.0
        %2193 = vmatpush.msra.mxu0 0.0
        %2194 = vmatpush.msra.mxu0 0.0
        %2195 = vmatpush.msra.mxu0 0.0
        %2196 = vmatpush.msra.mxu0 0.0
        %2197 = vmatpush.msra.mxu0 0.0
        %2198 = vmatpush.msra.mxu0 0.0
        %2199 = vmatpush.msra.mxu0 0.0
        %2200 = vmatpush.msra.mxu0 0.0
        %2201 = vmatpush.msra.mxu0 0.0
        %2202 = vmatpush.msra.mxu0 %v2188
        %2203 = vmatpush.msra.mxu0 %v2083
        %2204 = vmatpush.msra.mxu0 %v2082
        %2205 = vmatpush.msra.mxu0 %v2081
        %2206 = vmatmul.f32.gmra.mxu0 %v2091
        %v2207 = vpop.f32.mrf.mxu0
        %v2208 = vadd.f32 %v2087, %v2207
        %2209 = vmatmul.f32.gmra.mxu0 %v2094
        %v2210 = vpop.f32.mrf.mxu0
        %v2211 = vadd.f32 %v2087, %v2210
        %2212 = vmatmul.f32.gmra.mxu0 %v2097
        %v2213 = vpop.f32.mrf.mxu0
        %v2214 = vadd.f32 %v2087, %v2213
        %2215 = vmatmul.f32.gmra.mxu0 %v2100
        %v2216 = vpop.f32.mrf.mxu0
        %v2217 = vadd.f32 %v2087, %v2216
        %2218 = vmatmul.f32.gmra.mxu0 %v2103
        %v2219 = vpop.f32.mrf.mxu0
        %v2220 = vadd.f32 %v2087, %v2219
        %2221 = vmatmul.f32.gmra.mxu0 %v2106
        %v2222 = vpop.f32.mrf.mxu0
        %v2223 = vadd.f32 %v2087, %v2222
        %2224 = vmatmul.f32.gmra.mxu0 %v2109
        %v2225 = vpop.f32.mrf.mxu0
        %v2226 = vadd.f32 %v2087, %v2225
        %2227 = vmatmul.f32.gmra.mxu0 %v2112
        %v2228 = vpop.f32.mrf.mxu0
        %v2229 = vadd.f32 %v2087, %v2228
        %2230 = vmatmul.f32.gmra.mxu0 %v2115
        %v2231 = vpop.f32.mrf.mxu0
        %v2232 = vadd.f32 %v2087, %v2231
        %2233 = vmatmul.f32.gmra.mxu0 %v2118
        %v2234 = vpop.f32.mrf.mxu0
        %v2235 = vadd.f32 %v2087, %v2234
        %2236 = vmatmul.f32.gmra.mxu0 %v2121
        %v2237 = vpop.f32.mrf.mxu0
        %v2238 = vadd.f32 %v2087, %v2237
        %2239 = vmatmul.f32.gmra.mxu0 %v2124
        %v2240 = vpop.f32.mrf.mxu0
        %v2241 = vadd.f32 %v2087, %v2240
        %2242 = vmatmul.f32.gmra.mxu0 %v2127
        %v2243 = vpop.f32.mrf.mxu0
        %v2244 = vadd.f32 %v2087, %v2243
        %2245 = vmatmul.f32.gmra.mxu0 %v2130
        %v2246 = vpop.f32.mrf.mxu0
        %v2247 = vadd.f32 %v2087, %v2246
        %2248 = vmatmul.f32.gmra.mxu0 %v2133
        %v2249 = vpop.f32.mrf.mxu0
        %v2250 = vadd.f32 %v2087, %v2249
        %2251 = vmatmul.f32.gmra.mxu0 %v2136
        %v2252 = vpop.f32.mrf.mxu0
        %v2253 = vadd.f32 %v2087, %v2252
        %2254 = vmatmul.f32.gmra.mxu0 %v2139
        %v2255 = vpop.f32.mrf.mxu0
        %v2256 = vadd.f32 %v2087, %v2255
        %2257 = vmatmul.f32.gmra.mxu0 %v2142
        %v2258 = vpop.f32.mrf.mxu0
        %v2259 = vadd.f32 %v2087, %v2258
        %2260 = vmatmul.f32.gmra.mxu0 %v2145
        %v2261 = vpop.f32.mrf.mxu0
        %v2262 = vadd.f32 %v2087, %v2261
        %2263 = vmatmul.f32.gmra.mxu0 %v2148
        %v2264 = vpop.f32.mrf.mxu0
        %v2265 = vadd.f32 %v2087, %v2264
        %2266 = vmatmul.f32.gmra.mxu0 %v2151
        %v2267 = vpop.f32.mrf.mxu0
        %v2268 = vadd.f32 %v2087, %v2267
        %2269 = vmatmul.f32.gmra.mxu0 %v2154
        %v2270 = vpop.f32.mrf.mxu0
        %v2271 = vadd.f32 %v2087, %v2270
        %2272 = vmatmul.f32.gmra.mxu0 %v2157
        %v2273 = vpop.f32.mrf.mxu0
        %v2274 = vadd.f32 %v2087, %v2273
        %2275 = vmatmul.f32.gmra.mxu0 %v2160
        %v2276 = vpop.f32.mrf.mxu0
        %v2277 = vadd.f32 %v2087, %v2276
        %2278 = vmatmul.f32.gmra.mxu0 %v2163
        %v2279 = vpop.f32.mrf.mxu0
        %v2280 = vadd.f32 %v2087, %v2279
        %2281 = vmatmul.f32.gmra.mxu0 %v2166
        %v2282 = vpop.f32.mrf.mxu0
        %v2283 = vadd.f32 %v2087, %v2282
        %2284 = vmatmul.f32.gmra.mxu0 %v2169
        %v2285 = vpop.f32.mrf.mxu0
        %v2286 = vadd.f32 %v2087, %v2285
        %2287 = vmatmul.f32.gmra.mxu0 %v2172
        %v2288 = vpop.f32.mrf.mxu0
        %v2289 = vadd.f32 %v2087, %v2288
        %2290 = vmatmul.f32.gmra.mxu0 %v2175
        %v2291 = vpop.f32.mrf.mxu0
        %v2292 = vadd.f32 %v2087, %v2291
        %2293 = vmatmul.f32.gmra.mxu0 %v2178
        %v2294 = vpop.f32.mrf.mxu0
        %v2295 = vadd.f32 %v2087, %v2294
        %2296 = vmatmul.f32.gmra.mxu0 %v2181
        %v2297 = vpop.f32.mrf.mxu0
        %v2298 = vadd.f32 %v2087, %v2297
        %2299 = vmatmul.f32.gmra.mxu0 %v2184
        %v2300 = vpop.f32.mrf.mxu0
        %v2301 = vadd.f32 %v2087, %v2300
        %2302 = vdwg.mxu0
        %v2303 = vxor.u32 %v2208, 2147483648
        %v2304 = vxor.u32 %v2211, 2147483648
        %v2305 = vxor.u32 %v2214, 2147483648
        %v2306 = vxor.u32 %v2217, 2147483648
        %v2307 = vxor.u32 %v2220, 2147483648
        %v2308 = vxor.u32 %v2223, 2147483648
        %v2309 = vxor.u32 %v2226, 2147483648
        %v2310 = vxor.u32 %v2229, 2147483648
        %v2311 = vxor.u32 %v2232, 2147483648
        %v2312 = vxor.u32 %v2235, 2147483648
        %v2313 = vxor.u32 %v2238, 2147483648
        %v2314 = vxor.u32 %v2241, 2147483648
        %v2315 = vxor.u32 %v2244, 2147483648
        %v2316 = vxor.u32 %v2247, 2147483648
        %v2317 = vxor.u32 %v2250, 2147483648
        %v2318 = vxor.u32 %v2253, 2147483648
        %v2319 = vxor.u32 %v2256, 2147483648
        %v2320 = vxor.u32 %v2259, 2147483648
        %v2321 = vxor.u32 %v2262, 2147483648
        %v2322 = vxor.u32 %v2265, 2147483648
        %v2323 = vxor.u32 %v2268, 2147483648
        %v2324 = vxor.u32 %v2271, 2147483648
        %v2325 = vxor.u32 %v2274, 2147483648
        %v2326 = vxor.u32 %v2277, 2147483648
        %v2327 = vxor.u32 %v2280, 2147483648
        %v2328 = vxor.u32 %v2283, 2147483648
        %v2329 = vxor.u32 %v2286, 2147483648
        %v2330 = vxor.u32 %v2289, 2147483648
        %v2331 = vxor.u32 %v2292, 2147483648
        %v2332 = vxor.u32 %v2295, 2147483648
        %v2333 = vxor.u32 %v2298, 2147483648
        %v2334 = vxor.u32 %v2301, 2147483648
        %v2335 = vmul.f32 %v2303, 1.442695
        %v2336 = vpow.pop %v2335
        %v2337 = vmul.f32 %v2304, 1.442695
        %v2338 = vpow.pop %v2337
        %v2339 = vmul.f32 %v2305, 1.442695
        %v2340 = vpow.pop %v2339
        %v2341 = vmul.f32 %v2306, 1.442695
        %v2342 = vpow.pop %v2341
        %v2343 = vmul.f32 %v2307, 1.442695
        %v2344 = vpow.pop %v2343
        %v2345 = vmul.f32 %v2308, 1.442695
        %v2346 = vpow.pop %v2345
        %v2347 = vmul.f32 %v2309, 1.442695
        %v2348 = vpow.pop %v2347
        %v2349 = vmul.f32 %v2310, 1.442695
        %v2350 = vpow.pop %v2349
        %v2351 = vmul.f32 %v2311, 1.442695
        %v2352 = vpow.pop %v2351
        %v2353 = vmul.f32 %v2312, 1.442695
        %v2354 = vpow.pop %v2353
        %v2355 = vmul.f32 %v2313, 1.442695
        %v2356 = vpow.pop %v2355
        %v2357 = vmul.f32 %v2314, 1.442695
        %v2358 = vpow.pop %v2357
        %v2359 = vmul.f32 %v2315, 1.442695
        %v2360 = vpow.pop %v2359
        %v2361 = vmul.f32 %v2316, 1.442695
        %v2362 = vpow.pop %v2361
        %v2363 = vmul.f32 %v2317, 1.442695
        %v2364 = vpow.pop %v2363
        %v2365 = vmul.f32 %v2318, 1.442695
        %v2366 = vpow.pop %v2365
        %v2367 = vmul.f32 %v2319, 1.442695
        %v2368 = vpow.pop %v2367
        %v2369 = vmul.f32 %v2320, 1.442695
        %v2370 = vpow.pop %v2369
        %v2371 = vmul.f32 %v2321, 1.442695
        %v2372 = vpow.pop %v2371
        %v2373 = vmul.f32 %v2322, 1.442695
        %v2374 = vpow.pop %v2373
        %v2375 = vmul.f32 %v2323, 1.442695
        %v2376 = vpow.pop %v2375
        %v2377 = vmul.f32 %v2324, 1.442695
        %v2378 = vpow.pop %v2377
        %v2379 = vmul.f32 %v2325, 1.442695
        %v2380 = vpow.pop %v2379
        %v2381 = vmul.f32 %v2326, 1.442695
        %v2382 = vpow.pop %v2381
        %v2383 = vmul.f32 %v2327, 1.442695
        %v2384 = vpow.pop %v2383
        %v2385 = vmul.f32 %v2328, 1.442695
        %v2386 = vpow.pop %v2385
        %v2387 = vmul.f32 %v2329, 1.442695
        %v2388 = vpow.pop %v2387
        %v2389 = vmul.f32 %v2330, 1.442695
        %v2390 = vpow.pop %v2389
        %v2391 = vmul.f32 %v2331, 1.442695
        %v2392 = vpow.pop %v2391
        %v2393 = vmul.f32 %v2332, 1.442695
        %v2394 = vpow.pop %v2393
        %v2395 = vmul.f32 %v2333, 1.442695
        %v2396 = vpow.pop %v2395
        %v2397 = vmul.f32 %v2334, 1.442695
        %v2398 = vpow.pop %v2397
        %v2399 = vadd.f32 %v2336, 1.0
        %v2400 = vadd.f32 %v2338, 1.0
        %v2401 = vadd.f32 %v2340, 1.0
        %v2402 = vadd.f32 %v2342, 1.0
        %v2403 = vadd.f32 %v2344, 1.0
        %v2404 = vadd.f32 %v2346, 1.0
        %v2405 = vadd.f32 %v2348, 1.0
        %v2406 = vadd.f32 %v2350, 1.0
        %v2407 = vadd.f32 %v2352, 1.0
        %v2408 = vadd.f32 %v2354, 1.0
        %v2409 = vadd.f32 %v2356, 1.0
        %v2410 = vadd.f32 %v2358, 1.0
        %v2411 = vadd.f32 %v2360, 1.0
        %v2412 = vadd.f32 %v2362, 1.0
        %v2413 = vadd.f32 %v2364, 1.0
        %v2414 = vadd.f32 %v2366, 1.0
        %v2415 = vadd.f32 %v2368, 1.0
        %v2416 = vadd.f32 %v2370, 1.0
        %v2417 = vadd.f32 %v2372, 1.0
        %v2418 = vadd.f32 %v2374, 1.0
        %v2419 = vadd.f32 %v2376, 1.0
        %v2420 = vadd.f32 %v2378, 1.0
        %v2421 = vadd.f32 %v2380, 1.0
        %v2422 = vadd.f32 %v2382, 1.0
        %v2423 = vadd.f32 %v2384, 1.0
        %v2424 = vadd.f32 %v2386, 1.0
        %v2425 = vadd.f32 %v2388, 1.0
        %v2426 = vadd.f32 %v2390, 1.0
        %v2427 = vadd.f32 %v2392, 1.0
        %v2428 = vadd.f32 %v2394, 1.0
        %v2429 = vadd.f32 %v2396, 1.0
        %v2430 = vadd.f32 %v2398, 1.0
        %v2431 = vrcp.pop %v2399
        %v2432 = vmul.f32 %v2399, %v2431
        %v2433 = vsub.f32 1.0, %v2432
        %v2434 = vmul.f32 %v2431, %v2433
        %v2435 = vadd.f32 %v2431, %v2434
        %vm2436 = vweird.f32 %v2399
        %vm2437 = vweird.f32 %v2431
        %vm2438 = vmor %vm2436, %vm2437
        %v2439 = vsel %vm2438, %v2431, %v2435
        %v2440 = vand.u32 2147483647, %v2399
        %vm2441 = vcmp.eq.f32.partialorder %v2440, 8.507059e+37
        %v2442 = vand.u32 %v2399, 2147483648
        %v2443 = vor.u32 1.1754944e-38, %v2442
        %v2444 = vsel %vm2441, %v2443, %v2439
        %v2445 = vmul.f32 1.0, %v2444
        %v2446 = vrcp.pop %v2400
        %v2447 = vmul.f32 %v2400, %v2446
        %v2448 = vsub.f32 1.0, %v2447
        %v2449 = vmul.f32 %v2446, %v2448
        %v2450 = vadd.f32 %v2446, %v2449
        %vm2451 = vweird.f32 %v2400
        %vm2452 = vweird.f32 %v2446
        %vm2453 = vmor %vm2451, %vm2452
        %v2454 = vsel %vm2453, %v2446, %v2450
        %v2455 = vand.u32 2147483647, %v2400
        %vm2456 = vcmp.eq.f32.partialorder %v2455, 8.507059e+37
        %v2457 = vand.u32 %v2400, 2147483648
        %v2458 = vor.u32 1.1754944e-38, %v2457
        %v2459 = vsel %vm2456, %v2458, %v2454
        %v2460 = vmul.f32 1.0, %v2459
        %v2461 = vrcp.pop %v2401
        %v2462 = vmul.f32 %v2401, %v2461
        %v2463 = vsub.f32 1.0, %v2462
        %v2464 = vmul.f32 %v2461, %v2463
        %v2465 = vadd.f32 %v2461, %v2464
        %vm2466 = vweird.f32 %v2401
        %vm2467 = vweird.f32 %v2461
        %vm2468 = vmor %vm2466, %vm2467
        %v2469 = vsel %vm2468, %v2461, %v2465
        %v2470 = vand.u32 2147483647, %v2401
        %vm2471 = vcmp.eq.f32.partialorder %v2470, 8.507059e+37
        %v2472 = vand.u32 %v2401, 2147483648
        %v2473 = vor.u32 1.1754944e-38, %v2472
        %v2474 = vsel %vm2471, %v2473, %v2469
        %v2475 = vmul.f32 1.0, %v2474
        %v2476 = vrcp.pop %v2402
        %v2477 = vmul.f32 %v2402, %v2476
        %v2478 = vsub.f32 1.0, %v2477
        %v2479 = vmul.f32 %v2476, %v2478
        %v2480 = vadd.f32 %v2476, %v2479
        %vm2481 = vweird.f32 %v2402
        %vm2482 = vweird.f32 %v2476
        %vm2483 = vmor %vm2481, %vm2482
        %v2484 = vsel %vm2483, %v2476, %v2480
        %v2485 = vand.u32 2147483647, %v2402
        %vm2486 = vcmp.eq.f32.partialorder %v2485, 8.507059e+37
        %v2487 = vand.u32 %v2402, 2147483648
        %v2488 = vor.u32 1.1754944e-38, %v2487
        %v2489 = vsel %vm2486, %v2488, %v2484
        %v2490 = vmul.f32 1.0, %v2489
        %v2491 = vrcp.pop %v2403
        %v2492 = vmul.f32 %v2403, %v2491
        %v2493 = vsub.f32 1.0, %v2492
        %v2494 = vmul.f32 %v2491, %v2493
        %v2495 = vadd.f32 %v2491, %v2494
        %vm2496 = vweird.f32 %v2403
        %vm2497 = vweird.f32 %v2491
        %vm2498 = vmor %vm2496, %vm2497
        %v2499 = vsel %vm2498, %v2491, %v2495
        %v2500 = vand.u32 2147483647, %v2403
        %vm2501 = vcmp.eq.f32.partialorder %v2500, 8.507059e+37
        %v2502 = vand.u32 %v2403, 2147483648
        %v2503 = vor.u32 1.1754944e-38, %v2502
        %v2504 = vsel %vm2501, %v2503, %v2499
        %v2505 = vmul.f32 1.0, %v2504
        %v2506 = vrcp.pop %v2404
        %v2507 = vmul.f32 %v2404, %v2506
        %v2508 = vsub.f32 1.0, %v2507
        %v2509 = vmul.f32 %v2506, %v2508
        %v2510 = vadd.f32 %v2506, %v2509
        %vm2511 = vweird.f32 %v2404
        %vm2512 = vweird.f32 %v2506
        %vm2513 = vmor %vm2511, %vm2512
        %v2514 = vsel %vm2513, %v2506, %v2510
        %v2515 = vand.u32 2147483647, %v2404
        %vm2516 = vcmp.eq.f32.partialorder %v2515, 8.507059e+37
        %v2517 = vand.u32 %v2404, 2147483648
        %v2518 = vor.u32 1.1754944e-38, %v2517
        %v2519 = vsel %vm2516, %v2518, %v2514
        %v2520 = vmul.f32 1.0, %v2519
        %v2521 = vrcp.pop %v2405
        %v2522 = vmul.f32 %v2405, %v2521
        %v2523 = vsub.f32 1.0, %v2522
        %v2524 = vmul.f32 %v2521, %v2523
        %v2525 = vadd.f32 %v2521, %v2524
        %vm2526 = vweird.f32 %v2405
        %vm2527 = vweird.f32 %v2521
        %vm2528 = vmor %vm2526, %vm2527
        %v2529 = vsel %vm2528, %v2521, %v2525
        %v2530 = vand.u32 2147483647, %v2405
        %vm2531 = vcmp.eq.f32.partialorder %v2530, 8.507059e+37
        %v2532 = vand.u32 %v2405, 2147483648
        %v2533 = vor.u32 1.1754944e-38, %v2532
        %v2534 = vsel %vm2531, %v2533, %v2529
        %v2535 = vmul.f32 1.0, %v2534
        %v2536 = vrcp.pop %v2406
        %v2537 = vmul.f32 %v2406, %v2536
        %v2538 = vsub.f32 1.0, %v2537
        %v2539 = vmul.f32 %v2536, %v2538
        %v2540 = vadd.f32 %v2536, %v2539
        %vm2541 = vweird.f32 %v2406
        %vm2542 = vweird.f32 %v2536
        %vm2543 = vmor %vm2541, %vm2542
        %v2544 = vsel %vm2543, %v2536, %v2540
        %v2545 = vand.u32 2147483647, %v2406
        %vm2546 = vcmp.eq.f32.partialorder %v2545, 8.507059e+37
        %v2547 = vand.u32 %v2406, 2147483648
        %v2548 = vor.u32 1.1754944e-38, %v2547
        %v2549 = vsel %vm2546, %v2548, %v2544
        %v2550 = vmul.f32 1.0, %v2549
        %v2551 = vrcp.pop %v2407
        %v2552 = vmul.f32 %v2407, %v2551
        %v2553 = vsub.f32 1.0, %v2552
        %v2554 = vmul.f32 %v2551, %v2553
        %v2555 = vadd.f32 %v2551, %v2554
        %vm2556 = vweird.f32 %v2407
        %vm2557 = vweird.f32 %v2551
        %vm2558 = vmor %vm2556, %vm2557
        %v2559 = vsel %vm2558, %v2551, %v2555
        %v2560 = vand.u32 2147483647, %v2407
        %vm2561 = vcmp.eq.f32.partialorder %v2560, 8.507059e+37
        %v2562 = vand.u32 %v2407, 2147483648
        %v2563 = vor.u32 1.1754944e-38, %v2562
        %v2564 = vsel %vm2561, %v2563, %v2559
        %v2565 = vmul.f32 1.0, %v2564
        %v2566 = vrcp.pop %v2408
        %v2567 = vmul.f32 %v2408, %v2566
        %v2568 = vsub.f32 1.0, %v2567
        %v2569 = vmul.f32 %v2566, %v2568
        %v2570 = vadd.f32 %v2566, %v2569
        %vm2571 = vweird.f32 %v2408
        %vm2572 = vweird.f32 %v2566
        %vm2573 = vmor %vm2571, %vm2572
        %v2574 = vsel %vm2573, %v2566, %v2570
        %v2575 = vand.u32 2147483647, %v2408
        %vm2576 = vcmp.eq.f32.partialorder %v2575, 8.507059e+37
        %v2577 = vand.u32 %v2408, 2147483648
        %v2578 = vor.u32 1.1754944e-38, %v2577
        %v2579 = vsel %vm2576, %v2578, %v2574
        %v2580 = vmul.f32 1.0, %v2579
        %v2581 = vrcp.pop %v2409
        %v2582 = vmul.f32 %v2409, %v2581
        %v2583 = vsub.f32 1.0, %v2582
        %v2584 = vmul.f32 %v2581, %v2583
        %v2585 = vadd.f32 %v2581, %v2584
        %vm2586 = vweird.f32 %v2409
        %vm2587 = vweird.f32 %v2581
        %vm2588 = vmor %vm2586, %vm2587
        %v2589 = vsel %vm2588, %v2581, %v2585
        %v2590 = vand.u32 2147483647, %v2409
        %vm2591 = vcmp.eq.f32.partialorder %v2590, 8.507059e+37
        %v2592 = vand.u32 %v2409, 2147483648
        %v2593 = vor.u32 1.1754944e-38, %v2592
        %v2594 = vsel %vm2591, %v2593, %v2589
        %v2595 = vmul.f32 1.0, %v2594
        %v2596 = vrcp.pop %v2410
        %v2597 = vmul.f32 %v2410, %v2596
        %v2598 = vsub.f32 1.0, %v2597
        %v2599 = vmul.f32 %v2596, %v2598
        %v2600 = vadd.f32 %v2596, %v2599
        %vm2601 = vweird.f32 %v2410
        %vm2602 = vweird.f32 %v2596
        %vm2603 = vmor %vm2601, %vm2602
        %v2604 = vsel %vm2603, %v2596, %v2600
        %v2605 = vand.u32 2147483647, %v2410
        %vm2606 = vcmp.eq.f32.partialorder %v2605, 8.507059e+37
        %v2607 = vand.u32 %v2410, 2147483648
        %v2608 = vor.u32 1.1754944e-38, %v2607
        %v2609 = vsel %vm2606, %v2608, %v2604
        %v2610 = vmul.f32 1.0, %v2609
        %v2611 = vrcp.pop %v2411
        %v2612 = vmul.f32 %v2411, %v2611
        %v2613 = vsub.f32 1.0, %v2612
        %v2614 = vmul.f32 %v2611, %v2613
        %v2615 = vadd.f32 %v2611, %v2614
        %vm2616 = vweird.f32 %v2411
        %vm2617 = vweird.f32 %v2611
        %vm2618 = vmor %vm2616, %vm2617
        %v2619 = vsel %vm2618, %v2611, %v2615
        %v2620 = vand.u32 2147483647, %v2411
        %vm2621 = vcmp.eq.f32.partialorder %v2620, 8.507059e+37
        %v2622 = vand.u32 %v2411, 2147483648
        %v2623 = vor.u32 1.1754944e-38, %v2622
        %v2624 = vsel %vm2621, %v2623, %v2619
        %v2625 = vmul.f32 1.0, %v2624
        %v2626 = vrcp.pop %v2412
        %v2627 = vmul.f32 %v2412, %v2626
        %v2628 = vsub.f32 1.0, %v2627
        %v2629 = vmul.f32 %v2626, %v2628
        %v2630 = vadd.f32 %v2626, %v2629
        %vm2631 = vweird.f32 %v2412
        %vm2632 = vweird.f32 %v2626
        %vm2633 = vmor %vm2631, %vm2632
        %v2634 = vsel %vm2633, %v2626, %v2630
        %v2635 = vand.u32 2147483647, %v2412
        %vm2636 = vcmp.eq.f32.partialorder %v2635, 8.507059e+37
        %v2637 = vand.u32 %v2412, 2147483648
        %v2638 = vor.u32 1.1754944e-38, %v2637
        %v2639 = vsel %vm2636, %v2638, %v2634
        %v2640 = vmul.f32 1.0, %v2639
        %v2641 = vrcp.pop %v2413
        %v2642 = vmul.f32 %v2413, %v2641
        %v2643 = vsub.f32 1.0, %v2642
        %v2644 = vmul.f32 %v2641, %v2643
        %v2645 = vadd.f32 %v2641, %v2644
        %vm2646 = vweird.f32 %v2413
        %vm2647 = vweird.f32 %v2641
        %vm2648 = vmor %vm2646, %vm2647
        %v2649 = vsel %vm2648, %v2641, %v2645
        %v2650 = vand.u32 2147483647, %v2413
        %vm2651 = vcmp.eq.f32.partialorder %v2650, 8.507059e+37
        %v2652 = vand.u32 %v2413, 2147483648
        %v2653 = vor.u32 1.1754944e-38, %v2652
        %v2654 = vsel %vm2651, %v2653, %v2649
        %v2655 = vmul.f32 1.0, %v2654
        %v2656 = vrcp.pop %v2414
        %v2657 = vmul.f32 %v2414, %v2656
        %v2658 = vsub.f32 1.0, %v2657
        %v2659 = vmul.f32 %v2656, %v2658
        %v2660 = vadd.f32 %v2656, %v2659
        %vm2661 = vweird.f32 %v2414
        %vm2662 = vweird.f32 %v2656
        %vm2663 = vmor %vm2661, %vm2662
        %v2664 = vsel %vm2663, %v2656, %v2660
        %v2665 = vand.u32 2147483647, %v2414
        %vm2666 = vcmp.eq.f32.partialorder %v2665, 8.507059e+37
        %v2667 = vand.u32 %v2414, 2147483648
        %v2668 = vor.u32 1.1754944e-38, %v2667
        %v2669 = vsel %vm2666, %v2668, %v2664
        %v2670 = vmul.f32 1.0, %v2669
        %v2671 = vrcp.pop %v2415
        %v2672 = vmul.f32 %v2415, %v2671
        %v2673 = vsub.f32 1.0, %v2672
        %v2674 = vmul.f32 %v2671, %v2673
        %v2675 = vadd.f32 %v2671, %v2674
        %vm2676 = vweird.f32 %v2415
        %vm2677 = vweird.f32 %v2671
        %vm2678 = vmor %vm2676, %vm2677
        %v2679 = vsel %vm2678, %v2671, %v2675
        %v2680 = vand.u32 2147483647, %v2415
        %vm2681 = vcmp.eq.f32.partialorder %v2680, 8.507059e+37
        %v2682 = vand.u32 %v2415, 2147483648
        %v2683 = vor.u32 1.1754944e-38, %v2682
        %v2684 = vsel %vm2681, %v2683, %v2679
        %v2685 = vmul.f32 1.0, %v2684
        %v2686 = vrcp.pop %v2416
        %v2687 = vmul.f32 %v2416, %v2686
        %v2688 = vsub.f32 1.0, %v2687
        %v2689 = vmul.f32 %v2686, %v2688
        %v2690 = vadd.f32 %v2686, %v2689
        %vm2691 = vweird.f32 %v2416
        %vm2692 = vweird.f32 %v2686
        %vm2693 = vmor %vm2691, %vm2692
        %v2694 = vsel %vm2693, %v2686, %v2690
        %v2695 = vand.u32 2147483647, %v2416
        %vm2696 = vcmp.eq.f32.partialorder %v2695, 8.507059e+37
        %v2697 = vand.u32 %v2416, 2147483648
        %v2698 = vor.u32 1.1754944e-38, %v2697
        %v2699 = vsel %vm2696, %v2698, %v2694
        %v2700 = vmul.f32 1.0, %v2699
        %v2701 = vrcp.pop %v2417
        %v2702 = vmul.f32 %v2417, %v2701
        %v2703 = vsub.f32 1.0, %v2702
        %v2704 = vmul.f32 %v2701, %v2703
        %v2705 = vadd.f32 %v2701, %v2704
        %vm2706 = vweird.f32 %v2417
        %vm2707 = vweird.f32 %v2701
        %vm2708 = vmor %vm2706, %vm2707
        %v2709 = vsel %vm2708, %v2701, %v2705
        %v2710 = vand.u32 2147483647, %v2417
        %vm2711 = vcmp.eq.f32.partialorder %v2710, 8.507059e+37
        %v2712 = vand.u32 %v2417, 2147483648
        %v2713 = vor.u32 1.1754944e-38, %v2712
        %v2714 = vsel %vm2711, %v2713, %v2709
        %v2715 = vmul.f32 1.0, %v2714
        %v2716 = vrcp.pop %v2418
        %v2717 = vmul.f32 %v2418, %v2716
        %v2718 = vsub.f32 1.0, %v2717
        %v2719 = vmul.f32 %v2716, %v2718
        %v2720 = vadd.f32 %v2716, %v2719
        %vm2721 = vweird.f32 %v2418
        %vm2722 = vweird.f32 %v2716
        %vm2723 = vmor %vm2721, %vm2722
        %v2724 = vsel %vm2723, %v2716, %v2720
        %v2725 = vand.u32 2147483647, %v2418
        %vm2726 = vcmp.eq.f32.partialorder %v2725, 8.507059e+37
        %v2727 = vand.u32 %v2418, 2147483648
        %v2728 = vor.u32 1.1754944e-38, %v2727
        %v2729 = vsel %vm2726, %v2728, %v2724
        %v2730 = vmul.f32 1.0, %v2729
        %v2731 = vrcp.pop %v2419
        %v2732 = vmul.f32 %v2419, %v2731
        %v2733 = vsub.f32 1.0, %v2732
        %v2734 = vmul.f32 %v2731, %v2733
        %v2735 = vadd.f32 %v2731, %v2734
        %vm2736 = vweird.f32 %v2419
        %vm2737 = vweird.f32 %v2731
        %vm2738 = vmor %vm2736, %vm2737
        %v2739 = vsel %vm2738, %v2731, %v2735
        %v2740 = vand.u32 2147483647, %v2419
        %vm2741 = vcmp.eq.f32.partialorder %v2740, 8.507059e+37
        %v2742 = vand.u32 %v2419, 2147483648
        %v2743 = vor.u32 1.1754944e-38, %v2742
        %v2744 = vsel %vm2741, %v2743, %v2739
        %v2745 = vmul.f32 1.0, %v2744
        %v2746 = vrcp.pop %v2420
        %v2747 = vmul.f32 %v2420, %v2746
        %v2748 = vsub.f32 1.0, %v2747
        %v2749 = vmul.f32 %v2746, %v2748
        %v2750 = vadd.f32 %v2746, %v2749
        %vm2751 = vweird.f32 %v2420
        %vm2752 = vweird.f32 %v2746
        %vm2753 = vmor %vm2751, %vm2752
        %v2754 = vsel %vm2753, %v2746, %v2750
        %v2755 = vand.u32 2147483647, %v2420
        %vm2756 = vcmp.eq.f32.partialorder %v2755, 8.507059e+37
        %v2757 = vand.u32 %v2420, 2147483648
        %v2758 = vor.u32 1.1754944e-38, %v2757
        %v2759 = vsel %vm2756, %v2758, %v2754
        %v2760 = vmul.f32 1.0, %v2759
        %v2761 = vrcp.pop %v2421
        %v2762 = vmul.f32 %v2421, %v2761
        %v2763 = vsub.f32 1.0, %v2762
        %v2764 = vmul.f32 %v2761, %v2763
        %v2765 = vadd.f32 %v2761, %v2764
        %vm2766 = vweird.f32 %v2421
        %vm2767 = vweird.f32 %v2761
        %vm2768 = vmor %vm2766, %vm2767
        %v2769 = vsel %vm2768, %v2761, %v2765
        %v2770 = vand.u32 2147483647, %v2421
        %vm2771 = vcmp.eq.f32.partialorder %v2770, 8.507059e+37
        %v2772 = vand.u32 %v2421, 2147483648
        %v2773 = vor.u32 1.1754944e-38, %v2772
        %v2774 = vsel %vm2771, %v2773, %v2769
        %v2775 = vmul.f32 1.0, %v2774
        %v2776 = vrcp.pop %v2422
        %v2777 = vmul.f32 %v2422, %v2776
        %v2778 = vsub.f32 1.0, %v2777
        %v2779 = vmul.f32 %v2776, %v2778
        %v2780 = vadd.f32 %v2776, %v2779
        %vm2781 = vweird.f32 %v2422
        %vm2782 = vweird.f32 %v2776
        %vm2783 = vmor %vm2781, %vm2782
        %v2784 = vsel %vm2783, %v2776, %v2780
        %v2785 = vand.u32 2147483647, %v2422
        %vm2786 = vcmp.eq.f32.partialorder %v2785, 8.507059e+37
        %v2787 = vand.u32 %v2422, 2147483648
        %v2788 = vor.u32 1.1754944e-38, %v2787
        %v2789 = vsel %vm2786, %v2788, %v2784
        %v2790 = vmul.f32 1.0, %v2789
        %v2791 = vrcp.pop %v2423
        %v2792 = vmul.f32 %v2423, %v2791
        %v2793 = vsub.f32 1.0, %v2792
        %v2794 = vmul.f32 %v2791, %v2793
        %v2795 = vadd.f32 %v2791, %v2794
        %vm2796 = vweird.f32 %v2423
        %vm2797 = vweird.f32 %v2791
        %vm2798 = vmor %vm2796, %vm2797
        %v2799 = vsel %vm2798, %v2791, %v2795
        %v2800 = vand.u32 2147483647, %v2423
        %vm2801 = vcmp.eq.f32.partialorder %v2800, 8.507059e+37
        %v2802 = vand.u32 %v2423, 2147483648
        %v2803 = vor.u32 1.1754944e-38, %v2802
        %v2804 = vsel %vm2801, %v2803, %v2799
        %v2805 = vmul.f32 1.0, %v2804
        %v2806 = vrcp.pop %v2424
        %v2807 = vmul.f32 %v2424, %v2806
        %v2808 = vsub.f32 1.0, %v2807
        %v2809 = vmul.f32 %v2806, %v2808
        %v2810 = vadd.f32 %v2806, %v2809
        %vm2811 = vweird.f32 %v2424
        %vm2812 = vweird.f32 %v2806
        %vm2813 = vmor %vm2811, %vm2812
        %v2814 = vsel %vm2813, %v2806, %v2810
        %v2815 = vand.u32 2147483647, %v2424
        %vm2816 = vcmp.eq.f32.partialorder %v2815, 8.507059e+37
        %v2817 = vand.u32 %v2424, 2147483648
        %v2818 = vor.u32 1.1754944e-38, %v2817
        %v2819 = vsel %vm2816, %v2818, %v2814
        %v2820 = vmul.f32 1.0, %v2819
        %v2821 = vrcp.pop %v2425
        %v2822 = vmul.f32 %v2425, %v2821
        %v2823 = vsub.f32 1.0, %v2822
        %v2824 = vmul.f32 %v2821, %v2823
        %v2825 = vadd.f32 %v2821, %v2824
        %vm2826 = vweird.f32 %v2425
        %vm2827 = vweird.f32 %v2821
        %vm2828 = vmor %vm2826, %vm2827
        %v2829 = vsel %vm2828, %v2821, %v2825
        %v2830 = vand.u32 2147483647, %v2425
        %vm2831 = vcmp.eq.f32.partialorder %v2830, 8.507059e+37
        %v2832 = vand.u32 %v2425, 2147483648
        %v2833 = vor.u32 1.1754944e-38, %v2832
        %v2834 = vsel %vm2831, %v2833, %v2829
        %v2835 = vmul.f32 1.0, %v2834
        %v2836 = vrcp.pop %v2426
        %v2837 = vmul.f32 %v2426, %v2836
        %v2838 = vsub.f32 1.0, %v2837
        %v2839 = vmul.f32 %v2836, %v2838
        %v2840 = vadd.f32 %v2836, %v2839
        %vm2841 = vweird.f32 %v2426
        %vm2842 = vweird.f32 %v2836
        %vm2843 = vmor %vm2841, %vm2842
        %v2844 = vsel %vm2843, %v2836, %v2840
        %v2845 = vand.u32 2147483647, %v2426
        %vm2846 = vcmp.eq.f32.partialorder %v2845, 8.507059e+37
        %v2847 = vand.u32 %v2426, 2147483648
        %v2848 = vor.u32 1.1754944e-38, %v2847
        %v2849 = vsel %vm2846, %v2848, %v2844
        %v2850 = vmul.f32 1.0, %v2849
        %v2851 = vrcp.pop %v2427
        %v2852 = vmul.f32 %v2427, %v2851
        %v2853 = vsub.f32 1.0, %v2852
        %v2854 = vmul.f32 %v2851, %v2853
        %v2855 = vadd.f32 %v2851, %v2854
        %vm2856 = vweird.f32 %v2427
        %vm2857 = vweird.f32 %v2851
        %vm2858 = vmor %vm2856, %vm2857
        %v2859 = vsel %vm2858, %v2851, %v2855
        %v2860 = vand.u32 2147483647, %v2427
        %vm2861 = vcmp.eq.f32.partialorder %v2860, 8.507059e+37
        %v2862 = vand.u32 %v2427, 2147483648
        %v2863 = vor.u32 1.1754944e-38, %v2862
        %v2864 = vsel %vm2861, %v2863, %v2859
        %v2865 = vmul.f32 1.0, %v2864
        %v2866 = vrcp.pop %v2428
        %v2867 = vmul.f32 %v2428, %v2866
        %v2868 = vsub.f32 1.0, %v2867
        %v2869 = vmul.f32 %v2866, %v2868
        %v2870 = vadd.f32 %v2866, %v2869
        %vm2871 = vweird.f32 %v2428
        %vm2872 = vweird.f32 %v2866
        %vm2873 = vmor %vm2871, %vm2872
        %v2874 = vsel %vm2873, %v2866, %v2870
        %v2875 = vand.u32 2147483647, %v2428
        %vm2876 = vcmp.eq.f32.partialorder %v2875, 8.507059e+37
        %v2877 = vand.u32 %v2428, 2147483648
        %v2878 = vor.u32 1.1754944e-38, %v2877
        %v2879 = vsel %vm2876, %v2878, %v2874
        %v2880 = vmul.f32 1.0, %v2879
        %v2881 = vrcp.pop %v2429
        %v2882 = vmul.f32 %v2429, %v2881
        %v2883 = vsub.f32 1.0, %v2882
        %v2884 = vmul.f32 %v2881, %v2883
        %v2885 = vadd.f32 %v2881, %v2884
        %vm2886 = vweird.f32 %v2429
        %vm2887 = vweird.f32 %v2881
        %vm2888 = vmor %vm2886, %vm2887
        %v2889 = vsel %vm2888, %v2881, %v2885
        %v2890 = vand.u32 2147483647, %v2429
        %vm2891 = vcmp.eq.f32.partialorder %v2890, 8.507059e+37
        %v2892 = vand.u32 %v2429, 2147483648
        %v2893 = vor.u32 1.1754944e-38, %v2892
        %v2894 = vsel %vm2891, %v2893, %v2889
        %v2895 = vmul.f32 1.0, %v2894
        %v2896 = vrcp.pop %v2430
        %v2897 = vmul.f32 %v2430, %v2896
        %v2898 = vsub.f32 1.0, %v2897
        %v2899 = vmul.f32 %v2896, %v2898
        %v2900 = vadd.f32 %v2896, %v2899
        %vm2901 = vweird.f32 %v2430
        %vm2902 = vweird.f32 %v2896
        %vm2903 = vmor %vm2901, %vm2902
        %v2904 = vsel %vm2903, %v2896, %v2900
        %v2905 = vand.u32 2147483647, %v2430
        %vm2906 = vcmp.eq.f32.partialorder %v2905, 8.507059e+37
        %v2907 = vand.u32 %v2430, 2147483648
        %v2908 = vor.u32 1.1754944e-38, %v2907
        %v2909 = vsel %vm2906, %v2908, %v2904
        %v2910 = vmul.f32 1.0, %v2909
        %v2911 = vmul.f32 %v2208, %v2445
        %v2912 = vmul.f32 %v2211, %v2460
        %v2913 = vmul.f32 %v2214, %v2475
        %v2914 = vmul.f32 %v2217, %v2490
        %v2915 = vmul.f32 %v2220, %v2505
        %v2916 = vmul.f32 %v2223, %v2520
        %v2917 = vmul.f32 %v2226, %v2535
        %v2918 = vmul.f32 %v2229, %v2550
        %v2919 = vmul.f32 %v2232, %v2565
        %v2920 = vmul.f32 %v2235, %v2580
        %v2921 = vmul.f32 %v2238, %v2595
        %v2922 = vmul.f32 %v2241, %v2610
        %v2923 = vmul.f32 %v2244, %v2625
        %v2924 = vmul.f32 %v2247, %v2640
        %v2925 = vmul.f32 %v2250, %v2655
        %v2926 = vmul.f32 %v2253, %v2670
        %v2927 = vmul.f32 %v2256, %v2685
        %v2928 = vmul.f32 %v2259, %v2700
        %v2929 = vmul.f32 %v2262, %v2715
        %v2930 = vmul.f32 %v2265, %v2730
        %v2931 = vmul.f32 %v2268, %v2745
        %v2932 = vmul.f32 %v2271, %v2760
        %v2933 = vmul.f32 %v2274, %v2775
        %v2934 = vmul.f32 %v2277, %v2790
        %v2935 = vmul.f32 %v2280, %v2805
        %v2936 = vmul.f32 %v2283, %v2820
        %v2937 = vmul.f32 %v2286, %v2835
        %v2938 = vmul.f32 %v2289, %v2850
        %v2939 = vmul.f32 %v2292, %v2865
        %v2940 = vmul.f32 %v2295, %v2880
        %v2941 = vmul.f32 %v2298, %v2895
        %v2942 = vmul.f32 %v2301, %v2910
        %vm2943 = vcmask 130048
        %2944 = vst.msk [vmem:[%s334] sm:$0xff] %vm2943, %v2911
        %2945 = vst.msk [vmem:[%s334 + $0x8] sm:$0xff] %vm2943, %v2912
        %2946 = vst.msk [vmem:[%s334 + $0x10] sm:$0xff] %vm2943, %v2913
        %2947 = vst.msk [vmem:[%s334 + $0x18] sm:$0xff] %vm2943, %v2914
        %2948 = vst.msk [vmem:[%s334 + $0x20] sm:$0xff] %vm2943, %v2915
        %2949 = vst.msk [vmem:[%s334 + $0x28] sm:$0xff] %vm2943, %v2916
        %2950 = vst.msk [vmem:[%s334 + $0x30] sm:$0xff] %vm2943, %v2917
        %2951 = vst.msk [vmem:[%s334 + $0x38] sm:$0xff] %vm2943, %v2918
        %2952 = vst.msk [vmem:[%s334 + $0x40] sm:$0xff] %vm2943, %v2919
        %2953 = vst.msk [vmem:[%s334 + $0x48] sm:$0xff] %vm2943, %v2920
        %2954 = vst.msk [vmem:[%s334 + $0x50] sm:$0xff] %vm2943, %v2921
        %2955 = vst.msk [vmem:[%s334 + $0x58] sm:$0xff] %vm2943, %v2922
        %2956 = vst.msk [vmem:[%s334 + $0x60] sm:$0xff] %vm2943, %v2923
        %2957 = vst.msk [vmem:[%s334 + $0x68] sm:$0xff] %vm2943, %v2924
        %2958 = vst.msk [vmem:[%s334 + $0x70] sm:$0xff] %vm2943, %v2925
        %2959 = vst.msk [vmem:[%s334 + $0x78] sm:$0xff] %vm2943, %v2926
        %2960 = vst.msk [vmem:[%s334 + $0x80] sm:$0xff] %vm2943, %v2927
        %2961 = vst.msk [vmem:[%s334 + $0x88] sm:$0xff] %vm2943, %v2928
        %2962 = vst.msk [vmem:[%s334 + $0x90] sm:$0xff] %vm2943, %v2929
        %2963 = vst.msk [vmem:[%s334 + $0x98] sm:$0xff] %vm2943, %v2930
        %2964 = vst.msk [vmem:[%s334 + $0xa0] sm:$0xff] %vm2943, %v2931
        %2965 = vst.msk [vmem:[%s334 + $0xa8] sm:$0xff] %vm2943, %v2932
        %2966 = vst.msk [vmem:[%s334 + $0xb0] sm:$0xff] %vm2943, %v2933
        %2967 = vst.msk [vmem:[%s334 + $0xb8] sm:$0xff] %vm2943, %v2934
        %2968 = vst.msk [vmem:[%s334 + $0xc0] sm:$0xff] %vm2943, %v2935
        %2969 = vst.msk [vmem:[%s334 + $0xc8] sm:$0xff] %vm2943, %v2936
        %2970 = vst.msk [vmem:[%s334 + $0xd0] sm:$0xff] %vm2943, %v2937
        %2971 = vst.msk [vmem:[%s334 + $0xd8] sm:$0xff] %vm2943, %v2938
        %2972 = vst.msk [vmem:[%s334 + $0xe0] sm:$0xff] %vm2943, %v2939
        %2973 = vst.msk [vmem:[%s334 + $0xe8] sm:$0xff] %vm2943, %v2940
        %2974 = vst.msk [vmem:[%s334 + $0xf0] sm:$0xff] %vm2943, %v2941
        %2975 = vst.msk [vmem:[%s334 + $0xf8] sm:$0xff] %vm2943, %v2942
        %s2976 = sand.u32 %s183, 1
        %s2977 = scalar_lea.sflag [#allocation4], %s2976
        %s2978 = sand.u32 %s183, 1
        %s2979 = smul.addr %s2978, 256
        %s2980 = scalar_lea.vmem [#allocation3], %s2979
        // Predicated region
        $region41: #{tpu_custom_call.1} parent=39 // pred_check
          %p2981 = pneg %p193
        $region42: #{tpu_custom_call.1} parent=39 // pred_check_branch
          %2983 = sbr.rel (%p2981) target = $region44
        $region43: #{tpu_custom_call.1} parent=39 // pred_region
          %s2984 = smul.u32 16, %s24
          %2986 = vsyncadd %s2977, 0
          %s2987 = smul.addr %s2984, 2
          %s2988 = smul.addr %s23, 32
          %s2989 = sadd.s32 %s2987, %s2988
          %s2990 = smul.addr %s2989, 8
          %s2991 = scalar_lea.hbm %s5, %s2990
          %s2992 = sshll.u32 %s2980, 4
          %s2993 = int_to_ptr.vmem [resolvable:$true] %s2992
          %s2994 = sshll.u32 %s2991, 4
          %s2995 = int_to_ptr.hbm [resolvable:$true] %s2994
          %3000 = dma.vmem_to_hbm [thread:$0]  %s2993, 4096, %s2995, %s2977, 128, 128, 8
        $region44: #{tpu_custom_call.1} parent=39 // pred_fallthru
          _
      $region40: #{tpu_custom_call.1} parent=5 // pred_fallthru
        _
      %p3001 = scmp.le.s32.totalorder 2, %s14
      // Predicated region
      $region45: #{tpu_custom_call.1} parent=5 // pred_check
        %p3002 = pneg %p3001
      $region46: #{tpu_custom_call.1} parent=5 // pred_check_branch
        %3004 = sbr.rel (%p3002) target = $region48
      $region47: #{tpu_custom_call.1} parent=5 // pred_region
        %s3005 = ssub.s32 %s14, 2
        // Predicated region
        $region49: #{tpu_custom_call.1} parent=47 // pred_check
          %p3006 = pneg %p199
        $region50: #{tpu_custom_call.1} parent=47 // pred_check_branch
          %3008 = sbr.rel (%p3006) target = $region52
        $region51: #{tpu_custom_call.1} parent=47 // pred_region
          %s3009 = sand.u32 %s184, 1
          %s3010 = scalar_lea.sflag [#allocation4], %s3009
          %s3011 = sand.u32 %s184, 1
          %s3012 = smul.addr %s3011, 256
          %s3013 = scalar_lea.vmem [#allocation3], %s3012
          %3015 = dma.done %s3010, 4096
        $region52: #{tpu_custom_call.1} parent=47 // pred_fallthru
          _
      $region48: #{tpu_custom_call.1} parent=5 // pred_fallthru
        _
    $region6: #{tpu_custom_call.1} parent=1 // loop_footer
      %s18 = sadd.s32 1, %s14
    $region7: #{tpu_custom_call.1} parent=1 // loop_footer_branch
      %13 = sbr.rel target = $region3
    $region8: #{tpu_custom_call.1} parent=1 // loop_exit
      _
    %3016 = vsyncpa [#allocation4], 1
    %s3017 = scalar_lea.sflag [#allocation4], 1
    %3018 = vsyncpa %s3017, 1

</llo_original>
